<compile_context>
chip_gen: v7x
topology: tpu7x:2x2x1
jax: 0.10.0
libtpu: 0.0.40
codegen_flags: <defaults>
</compile_context>

<pallas_src>
import math

import jax
import jax.numpy as jnp
from jax.experimental import pallas as pl
from jax.experimental.pallas import tpu as pltpu


def _make_lstm_kernel(num_layers, hidden, seq_len, future, in_dims):
    """Builds a Pallas kernel running the full LSTM recurrence + linear head.

    Weight / bias columns are expected pre-permuted to gate order (i, f, o, g).
    """
    H = hidden
    L = num_layers

    def kernel(*refs):
        # --- unpack refs: x, per-layer (Wih^T, Whh^T, bias), Wlin_row, blin, out
        x_ref = refs[0]
        idx = 1
        layer_refs = []
        for _ in range(L):
            layer_refs.append((refs[idx], refs[idx + 1], refs[idx + 2]))
            idx += 3
        lw_ref = refs[idx]          # (1, H)   (out_dim == 1)
        lb_ref = refs[idx + 1]      # (1, 1)
        out_ref = refs[idx + 2]     # (B, T + future)

        B = x_ref.shape[0]

        # Load weights once (tiny at H=32; stays vreg/VMEM resident).
        wih = [layer_refs[l][0][...] for l in range(L)]   # (in_d, 4H)
        whh = [layer_refs[l][1][...] for l in range(L)]   # (H, 4H)
        bias = [layer_refs[l][2][...] for l in range(L)]  # (1, 4H)
        lw = lw_ref[...]                                  # (1, H)
        lb = lb_ref[...]                                  # (1, 1)

        # zero initial hidden / cell states (matches torch.zeros in forward)
        zeros = jnp.zeros((B, H), jnp.float32)
        h = [zeros for _ in range(L)]
        c = [zeros for _ in range(L)]

        def step(x_term0, h, c):
            """One timestep through all layers; state carried in registers."""
            h = list(h)
            c = list(c)
            x_term = x_term0
            for l in range(L):
                if l > 0:
                    x_term = jnp.dot(h[l - 1], wih[l],
                                     preferred_element_type=jnp.float32)
                gates = (x_term
                         + jnp.dot(h[l], whh[l],
                                   preferred_element_type=jnp.float32)
                         + bias[l])
                # permuted gate order (i, f, o, g): one sigmoid, one tanh
                sig = jax.nn.sigmoid(gates[:, :3 * H])
                g_g = jnp.tanh(gates[:, 3 * H:])
                i_g = sig[:, 0:H]
                f_g = sig[:, H:2 * H]
                o_g = sig[:, 2 * H:3 * H]
                c_new = f_g * c[l] + i_g * g_g
                h_new = o_g * jnp.tanh(c_new)
                h[l] = h_new
                c[l] = c_new
            return h, c

        def head(h_top):
            # out_dim == 1: VPU multiply + lane reduction (no 1-column MXU matmul)
            return jnp.sum(h_top * lw, axis=-1, keepdims=True) + lb   # (B, 1)

        # ---- conditioning phase (fully unrolled) ----
        x_all = x_ref[...]                     # (B, T)
        wih0 = wih[0]                          # (1, 4H)  (inputDim == 1)
        # layer-0 input projections have no recurrence dependency: hoist them.
        x_terms = [x_all[:, t:t + 1] * wih0 for t in range(seq_len)]

        h_top_cond = []
        for t in range(seq_len):
            h, c = step(x_terms[t], h, c)
            h_top_cond.append(h[-1])

        # Deferred, batched linear head for the conditioning outputs
        # (off the serial recurrence path).
        h_stack = jnp.stack(h_top_cond, axis=1)                     # (B, T, H)
        cond_out = jnp.sum(h_stack * lw[:, None, :], axis=-1) + lb  # (B, T)

        # ---- autoregressive "future" phase (fully unrolled) ----
        fut_outs = []
        if future > 0:
            # Recompute the last conditioning output directly from h[-1] so the
            # feedback path does not serialize on the batched head above.
            prev = head(h[-1])                                      # (B, 1)
            for _ in range(future):
                h, c = step(prev * wih0, h, c)
                prev = head(h[-1])
                fut_outs.append(prev)

        # ---- single lane-dense store of the full result ----
        if fut_outs:
            out_ref[...] = jnp.concatenate([cond_out] + fut_outs, axis=1)
        else:
            out_ref[...] = cond_out

    return kernel


def lstm_net_forward(x, params, *, hidden, future=0):
    """Pallas equivalent of LSTMNet.forward(x, future).  x: (B, T) float32."""
    B, T = x.shape
    layers = params["layers"]            # [(W_ih, W_hh, b_ih, b_hh), ...]
    lw, lb = params["linear"]            # (OUT, H), (OUT,)
    out_dim = lw.shape[0]
    num_layers = len(layers)
    H = hidden

    # The autoregressive feedback (output -> layer-0 input) and the (B, T)
    # chunked input require outputDim == inputDim == 1 (module defaults).
    assert out_dim == 1, "kernel supports outputDim == 1 (module default)"
    assert layers[0][0].shape[1] == 1, "layer-0 inputDim must be 1"
    # TODO(synk): generalize the head/output layout for outputDim > 1.

    def permute_gates(w):
        # rows ordered (i, f, g, o) -> (i, f, o, g); free at trace time
        return jnp.concatenate([w[:2 * H], w[3 * H:4 * H], w[2 * H:3 * H]],
                               axis=0)

    kernel_inputs = [x.astype(jnp.float32)]                              # (B, T)
    in_dims = []
    for (w_ih, w_hh, b_ih, b_hh) in layers:
        in_dims.append(w_ih.shape[1])
        kernel_inputs.append(
            jnp.transpose(permute_gates(w_ih)).astype(jnp.float32))      # (IN, 4H)
        kernel_inputs.append(
            jnp.transpose(permute_gates(w_hh)).astype(jnp.float32))      # (H, 4H)
        kernel_inputs.append(
            permute_gates(b_ih + b_hh).reshape(1, -1).astype(jnp.float32))  # (1, 4H)
    kernel_inputs.append(lw.astype(jnp.float32))                         # (1, H)
    kernel_inputs.append(lb.reshape(1, 1).astype(jnp.float32))           # (1, 1)

    kernel = _make_lstm_kernel(num_layers, H, T, future, tuple(in_dims))

    out = pl.pallas_call(
        kernel,
        out_shape=jax.ShapeDtypeStruct((B, T + future), jnp.float32),
        in_specs=[pl.BlockSpec(memory_space=pltpu.MemorySpace.VMEM)
                  for _ in kernel_inputs],
        out_specs=pl.BlockSpec(memory_space=pltpu.MemorySpace.VMEM),
    )(*kernel_inputs)
    return out                               # (B, T + future)


def init_params(key, num_layers=1, input_dim=1, hidden=32, out_dim=1):
    """Deterministic parameter init mirroring nn.LSTMCell / nn.Linear defaults
    plus the forget-gate bias fill done in LSTMNet.__init__ (both b_ih and b_hh)."""
    layers = []
    k = 1.0 / math.sqrt(hidden)
    for l in range(num_layers):
        in_d = input_dim if l == 0 else hidden
        key, k1, k2, k3, k4 = jax.random.split(key, 5)
        w_ih = jax.random.uniform(k1, (4 * hidden, in_d), jnp.float32, -k, k)
        w_hh = jax.random.uniform(k2, (4 * hidden, hidden), jnp.float32, -k, k)
        b_ih = jax.random.uniform(k3, (4 * hidden,), jnp.float32, -k, k)
        b_hh = jax.random.uniform(k4, (4 * hidden,), jnp.float32, -k, k)
        # bias[start:end].fill_(1.0) with start=H, end=2H (forget gate), both biases
        b_ih = b_ih.at[hidden:2 * hidden].set(1.0)
        b_hh = b_hh.at[hidden:2 * hidden].set(1.0)
        layers.append((w_ih, w_hh, b_ih, b_hh))
    key, k5, k6 = jax.random.split(key, 3)
    lw = jax.random.uniform(k5, (out_dim, hidden), jnp.float32, -k, k)
    lb = jax.random.uniform(k6, (out_dim,), jnp.float32, -k, k)
    return {"layers": layers, "linear": (lw, lb)}


def reference_forward(x, params, *, hidden, future=0):
    """Pure-JAX reference matching the PyTorch forward semantics (gate order i,f,g,o)."""
    B, T = x.shape
    layers = params["layers"]
    lw, lb = params["linear"]
    L = len(layers)
    h = [jnp.zeros((B, hidden), jnp.float32) for _ in range(L)]
    c = [jnp.zeros((B, hidden), jnp.float32) for _ in range(L)]
    outs = []

    def step(inp):
        cur = inp
        for l in range(L):
            w_ih, w_hh, b_ih, b_hh = layers[l]
            gates = cur @ w_ih.T + b_ih + h[l] @ w_hh.T + b_hh
            i = jax.nn.sigmoid(gates[:, :hidden])
            f = jax.nn.sigmoid(gates[:, hidden:2 * hidden])
            g = jnp.tanh(gates[:, 2 * hidden:3 * hidden])
            o = jax.nn.sigmoid(gates[:, 3 * hidden:4 * hidden])
            c[l] = f * c[l] + i * g
            h[l] = o * jnp.tanh(c[l])
            cur = h[l]
        return cur @ lw.T + lb

    out = None
    for t in range(T):
        out = step(x[:, t:t + 1])
        outs.append(out)
    for _ in range(future):
        out = step(out)
        outs.append(out)
    return jnp.stack(outs, 1)[:, :, 0]


if __name__ == "__main__":
    B, T, H = 2, 8, 32
    NUM_LAYERS = 1
    FUTURE = 2

    key = jax.random.PRNGKey(0)
    key, xk = jax.random.split(key)
    x = jax.random.normal(xk, (B, T), jnp.float32)
    params = init_params(key, num_layers=NUM_LAYERS, input_dim=1,
                         hidden=H, out_dim=1)

    out = lstm_net_forward(x, params, hidden=H, future=FUTURE)
    out = jax.block_until_ready(out)

    ref = reference_forward(x, params, hidden=H, future=FUTURE)
    assert out.shape == (B, T + FUTURE), out.shape
    assert jnp.allclose(out, ref, atol=1e-5, rtol=1e-5), \
        float(jnp.max(jnp.abs(out - ref)))

    print("KERNEL_OK")
</pallas_src>

<mosaic_0001>
module attributes {stable_mosaic.version = 11 : i64} {
  func.func @kernel(%arg0: memref<2x8xf32, #tpu.memory_space<vmem>>, %arg1: memref<1x128xf32, #tpu.memory_space<vmem>>, %arg2: memref<32x128xf32, #tpu.memory_space<vmem>>, %arg3: memref<1x128xf32, #tpu.memory_space<vmem>>, %arg4: memref<1x32xf32, #tpu.memory_space<vmem>>, %arg5: memref<1x1xf32, #tpu.memory_space<vmem>>, %arg6: memref<2x10xf32, #tpu.memory_space<vmem>>) attributes {dimension_semantics = [], scalar_prefetch = 0 : i64, scratch_operands = 0 : i64, tpu.core_type = #tpu.core_type<tc>} {
    %c0 = arith.constant 0 : index
    %c0_0 = arith.constant 0 : index
    %0 = vector.load %arg1[%c0, %c0_0] : memref<1x128xf32, #tpu.memory_space<vmem>>, vector<1x128xf32>
    %c0_1 = arith.constant 0 : index
    %c0_2 = arith.constant 0 : index
    %1 = vector.load %arg2[%c0_1, %c0_2] : memref<32x128xf32, #tpu.memory_space<vmem>>, vector<32x128xf32>
    %c0_3 = arith.constant 0 : index
    %c0_4 = arith.constant 0 : index
    %2 = vector.load %arg3[%c0_3, %c0_4] : memref<1x128xf32, #tpu.memory_space<vmem>>, vector<1x128xf32>
    %c0_5 = arith.constant 0 : index
    %c0_6 = arith.constant 0 : index
    %3 = vector.load %arg4[%c0_5, %c0_6] : memref<1x32xf32, #tpu.memory_space<vmem>>, vector<1x32xf32>
    %c0_7 = arith.constant 0 : index
    %c0_8 = arith.constant 0 : index
    %4 = vector.load %arg5[%c0_7, %c0_8] : memref<1x1xf32, #tpu.memory_space<vmem>>, vector<1x1xf32>
    %cst = arith.constant 0.000000e+00 : f32
    %5 = vector.broadcast %cst : f32 to vector<2x32xf32>
    %c0_9 = arith.constant 0 : index
    %c0_10 = arith.constant 0 : index
    %6 = vector.load %arg0[%c0_9, %c0_10] : memref<2x8xf32, #tpu.memory_space<vmem>>, vector<2x8xf32>
    %7 = vector.extract_strided_slice %6 {offsets = [0, 0], sizes = [2, 1], strides = [1, 1]} : vector<2x8xf32> to vector<2x1xf32>
    %8 = vector.broadcast %7 : vector<2x1xf32> to vector<2x128xf32>
    %9 = vector.broadcast %0 : vector<1x128xf32> to vector<2x128xf32>
    %10 = arith.mulf %8, %9 : vector<2x128xf32>
    %11 = vector.extract_strided_slice %6 {offsets = [0, 1], sizes = [2, 1], strides = [1, 1]} : vector<2x8xf32> to vector<2x1xf32>
    %12 = vector.broadcast %11 : vector<2x1xf32> to vector<2x128xf32>
    %13 = vector.broadcast %0 : vector<1x128xf32> to vector<2x128xf32>
    %14 = arith.mulf %12, %13 : vector<2x128xf32>
    %15 = vector.extract_strided_slice %6 {offsets = [0, 2], sizes = [2, 1], strides = [1, 1]} : vector<2x8xf32> to vector<2x1xf32>
    %16 = vector.broadcast %15 : vector<2x1xf32> to vector<2x128xf32>
    %17 = vector.broadcast %0 : vector<1x128xf32> to vector<2x128xf32>
    %18 = arith.mulf %16, %17 : vector<2x128xf32>
    %19 = vector.extract_strided_slice %6 {offsets = [0, 3], sizes = [2, 1], strides = [1, 1]} : vector<2x8xf32> to vector<2x1xf32>
    %20 = vector.broadcast %19 : vector<2x1xf32> to vector<2x128xf32>
    %21 = vector.broadcast %0 : vector<1x128xf32> to vector<2x128xf32>
    %22 = arith.mulf %20, %21 : vector<2x128xf32>
    %23 = vector.extract_strided_slice %6 {offsets = [0, 4], sizes = [2, 1], strides = [1, 1]} : vector<2x8xf32> to vector<2x1xf32>
    %24 = vector.broadcast %23 : vector<2x1xf32> to vector<2x128xf32>
    %25 = vector.broadcast %0 : vector<1x128xf32> to vector<2x128xf32>
    %26 = arith.mulf %24, %25 : vector<2x128xf32>
    %27 = vector.extract_strided_slice %6 {offsets = [0, 5], sizes = [2, 1], strides = [1, 1]} : vector<2x8xf32> to vector<2x1xf32>
    %28 = vector.broadcast %27 : vector<2x1xf32> to vector<2x128xf32>
    %29 = vector.broadcast %0 : vector<1x128xf32> to vector<2x128xf32>
    %30 = arith.mulf %28, %29 : vector<2x128xf32>
    %31 = vector.extract_strided_slice %6 {offsets = [0, 6], sizes = [2, 1], strides = [1, 1]} : vector<2x8xf32> to vector<2x1xf32>
    %32 = vector.broadcast %31 : vector<2x1xf32> to vector<2x128xf32>
    %33 = vector.broadcast %0 : vector<1x128xf32> to vector<2x128xf32>
    %34 = arith.mulf %32, %33 : vector<2x128xf32>
    %35 = vector.extract_strided_slice %6 {offsets = [0, 7], sizes = [2, 1], strides = [1, 1]} : vector<2x8xf32> to vector<2x1xf32>
    %36 = vector.broadcast %35 : vector<2x1xf32> to vector<2x128xf32>
    %37 = vector.broadcast %0 : vector<1x128xf32> to vector<2x128xf32>
    %38 = arith.mulf %36, %37 : vector<2x128xf32>
    %cst_11 = arith.constant dense<0.000000e+00> : vector<2x128xf32>
    %39 = tpu.matmul %5, %1, %cst_11 {dimension_numbers = #tpu.dot_dimension_numbers<[1], [0], [0], [1], [0, 0, 1, 1], [], []>} : vector<2x32xf32>, vector<32x128xf32>, vector<2x128xf32> -> vector<2x128xf32>
    %40 = arith.addf %10, %39 : vector<2x128xf32>
    %41 = vector.broadcast %2 : vector<1x128xf32> to vector<2x128xf32>
    %42 = arith.addf %40, %41 : vector<2x128xf32>
    %43 = vector.extract_strided_slice %42 {offsets = [0, 0], sizes = [2, 96], strides = [1, 1]} : vector<2x128xf32> to vector<2x96xf32>
    %44 = arith.negf %43 : vector<2x96xf32>
    %45 = math.exp %44 : vector<2x96xf32>
    %cst_12 = arith.constant 1.000000e+00 : f32
    %46 = vector.broadcast %cst_12 : f32 to vector<2x96xf32>
    %47 = arith.addf %46, %45 : vector<2x96xf32>
    %48 = arith.divf %46, %47 : vector<2x96xf32>
    %49 = vector.extract_strided_slice %42 {offsets = [0, 96], sizes = [2, 32], strides = [1, 1]} : vector<2x128xf32> to vector<2x32xf32>
    %50 = math.tanh %49 : vector<2x32xf32>
    %51 = vector.extract_strided_slice %48 {offsets = [0, 0], sizes = [2, 32], strides = [1, 1]} : vector<2x96xf32> to vector<2x32xf32>
    %52 = vector.extract_strided_slice %48 {offsets = [0, 32], sizes = [2, 32], strides = [1, 1]} : vector<2x96xf32> to vector<2x32xf32>
    %53 = vector.extract_strided_slice %48 {offsets = [0, 64], sizes = [2, 32], strides = [1, 1]} : vector<2x96xf32> to vector<2x32xf32>
    %54 = arith.mulf %52, %5 : vector<2x32xf32>
    %55 = arith.mulf %51, %50 : vector<2x32xf32>
    %56 = arith.addf %54, %55 : vector<2x32xf32>
    %57 = math.tanh %56 : vector<2x32xf32>
    %58 = arith.mulf %53, %57 : vector<2x32xf32>
    %cst_13 = arith.constant dense<0.000000e+00> : vector<2x128xf32>
    %59 = tpu.matmul %58, %1, %cst_13 {dimension_numbers = #tpu.dot_dimension_numbers<[1], [0], [0], [1], [0, 0, 1, 1], [], []>} : vector<2x32xf32>, vector<32x128xf32>, vector<2x128xf32> -> vector<2x128xf32>
    %60 = arith.addf %14, %59 : vector<2x128xf32>
    %61 = vector.broadcast %2 : vector<1x128xf32> to vector<2x128xf32>
    %62 = arith.addf %60, %61 : vector<2x128xf32>
    %63 = vector.extract_strided_slice %62 {offsets = [0, 0], sizes = [2, 96], strides = [1, 1]} : vector<2x128xf32> to vector<2x96xf32>
    %64 = arith.negf %63 : vector<2x96xf32>
    %65 = math.exp %64 : vector<2x96xf32>
    %cst_14 = arith.constant 1.000000e+00 : f32
    %66 = vector.broadcast %cst_14 : f32 to vector<2x96xf32>
    %67 = arith.addf %66, %65 : vector<2x96xf32>
    %68 = arith.divf %66, %67 : vector<2x96xf32>
    %69 = vector.extract_strided_slice %62 {offsets = [0, 96], sizes = [2, 32], strides = [1, 1]} : vector<2x128xf32> to vector<2x32xf32>
    %70 = math.tanh %69 : vector<2x32xf32>
    %71 = vector.extract_strided_slice %68 {offsets = [0, 0], sizes = [2, 32], strides = [1, 1]} : vector<2x96xf32> to vector<2x32xf32>
    %72 = vector.extract_strided_slice %68 {offsets = [0, 32], sizes = [2, 32], strides = [1, 1]} : vector<2x96xf32> to vector<2x32xf32>
    %73 = vector.extract_strided_slice %68 {offsets = [0, 64], sizes = [2, 32], strides = [1, 1]} : vector<2x96xf32> to vector<2x32xf32>
    %74 = arith.mulf %72, %56 : vector<2x32xf32>
    %75 = arith.mulf %71, %70 : vector<2x32xf32>
    %76 = arith.addf %74, %75 : vector<2x32xf32>
    %77 = math.tanh %76 : vector<2x32xf32>
    %78 = arith.mulf %73, %77 : vector<2x32xf32>
    %cst_15 = arith.constant dense<0.000000e+00> : vector<2x128xf32>
    %79 = tpu.matmul %78, %1, %cst_15 {dimension_numbers = #tpu.dot_dimension_numbers<[1], [0], [0], [1], [0, 0, 1, 1], [], []>} : vector<2x32xf32>, vector<32x128xf32>, vector<2x128xf32> -> vector<2x128xf32>
    %80 = arith.addf %18, %79 : vector<2x128xf32>
    %81 = vector.broadcast %2 : vector<1x128xf32> to vector<2x128xf32>
    %82 = arith.addf %80, %81 : vector<2x128xf32>
    %83 = vector.extract_strided_slice %82 {offsets = [0, 0], sizes = [2, 96], strides = [1, 1]} : vector<2x128xf32> to vector<2x96xf32>
    %84 = arith.negf %83 : vector<2x96xf32>
    %85 = math.exp %84 : vector<2x96xf32>
    %cst_16 = arith.constant 1.000000e+00 : f32
    %86 = vector.broadcast %cst_16 : f32 to vector<2x96xf32>
    %87 = arith.addf %86, %85 : vector<2x96xf32>
    %88 = arith.divf %86, %87 : vector<2x96xf32>
    %89 = vector.extract_strided_slice %82 {offsets = [0, 96], sizes = [2, 32], strides = [1, 1]} : vector<2x128xf32> to vector<2x32xf32>
    %90 = math.tanh %89 : vector<2x32xf32>
    %91 = vector.extract_strided_slice %88 {offsets = [0, 0], sizes = [2, 32], strides = [1, 1]} : vector<2x96xf32> to vector<2x32xf32>
    %92 = vector.extract_strided_slice %88 {offsets = [0, 32], sizes = [2, 32], strides = [1, 1]} : vector<2x96xf32> to vector<2x32xf32>
    %93 = vector.extract_strided_slice %88 {offsets = [0, 64], sizes = [2, 32], strides = [1, 1]} : vector<2x96xf32> to vector<2x32xf32>
    %94 = arith.mulf %92, %76 : vector<2x32xf32>
    %95 = arith.mulf %91, %90 : vector<2x32xf32>
    %96 = arith.addf %94, %95 : vector<2x32xf32>
    %97 = math.tanh %96 : vector<2x32xf32>
    %98 = arith.mulf %93, %97 : vector<2x32xf32>
    %cst_17 = arith.constant dense<0.000000e+00> : vector<2x128xf32>
    %99 = tpu.matmul %98, %1, %cst_17 {dimension_numbers = #tpu.dot_dimension_numbers<[1], [0], [0], [1], [0, 0, 1, 1], [], []>} : vector<2x32xf32>, vector<32x128xf32>, vector<2x128xf32> -> vector<2x128xf32>
    %100 = arith.addf %22, %99 : vector<2x128xf32>
    %101 = vector.broadcast %2 : vector<1x128xf32> to vector<2x128xf32>
    %102 = arith.addf %100, %101 : vector<2x128xf32>
    %103 = vector.extract_strided_slice %102 {offsets = [0, 0], sizes = [2, 96], strides = [1, 1]} : vector<2x128xf32> to vector<2x96xf32>
    %104 = arith.negf %103 : vector<2x96xf32>
    %105 = math.exp %104 : vector<2x96xf32>
    %cst_18 = arith.constant 1.000000e+00 : f32
    %106 = vector.broadcast %cst_18 : f32 to vector<2x96xf32>
    %107 = arith.addf %106, %105 : vector<2x96xf32>
    %108 = arith.divf %106, %107 : vector<2x96xf32>
    %109 = vector.extract_strided_slice %102 {offsets = [0, 96], sizes = [2, 32], strides = [1, 1]} : vector<2x128xf32> to vector<2x32xf32>
    %110 = math.tanh %109 : vector<2x32xf32>
    %111 = vector.extract_strided_slice %108 {offsets = [0, 0], sizes = [2, 32], strides = [1, 1]} : vector<2x96xf32> to vector<2x32xf32>
    %112 = vector.extract_strided_slice %108 {offsets = [0, 32], sizes = [2, 32], strides = [1, 1]} : vector<2x96xf32> to vector<2x32xf32>
    %113 = vector.extract_strided_slice %108 {offsets = [0, 64], sizes = [2, 32], strides = [1, 1]} : vector<2x96xf32> to vector<2x32xf32>
    %114 = arith.mulf %112, %96 : vector<2x32xf32>
    %115 = arith.mulf %111, %110 : vector<2x32xf32>
    %116 = arith.addf %114, %115 : vector<2x32xf32>
    %117 = math.tanh %116 : vector<2x32xf32>
    %118 = arith.mulf %113, %117 : vector<2x32xf32>
    %cst_19 = arith.constant dense<0.000000e+00> : vector<2x128xf32>
    %119 = tpu.matmul %118, %1, %cst_19 {dimension_numbers = #tpu.dot_dimension_numbers<[1], [0], [0], [1], [0, 0, 1, 1], [], []>} : vector<2x32xf32>, vector<32x128xf32>, vector<2x128xf32> -> vector<2x128xf32>
    %120 = arith.addf %26, %119 : vector<2x128xf32>
    %121 = vector.broadcast %2 : vector<1x128xf32> to vector<2x128xf32>
    %122 = arith.addf %120, %121 : vector<2x128xf32>
    %123 = vector.extract_strided_slice %122 {offsets = [0, 0], sizes = [2, 96], strides = [1, 1]} : vector<2x128xf32> to vector<2x96xf32>
    %124 = arith.negf %123 : vector<2x96xf32>
    %125 = math.exp %124 : vector<2x96xf32>
    %cst_20 = arith.constant 1.000000e+00 : f32
    %126 = vector.broadcast %cst_20 : f32 to vector<2x96xf32>
    %127 = arith.addf %126, %125 : vector<2x96xf32>
    %128 = arith.divf %126, %127 : vector<2x96xf32>
    %129 = vector.extract_strided_slice %122 {offsets = [0, 96], sizes = [2, 32], strides = [1, 1]} : vector<2x128xf32> to vector<2x32xf32>
    %130 = math.tanh %129 : vector<2x32xf32>
    %131 = vector.extract_strided_slice %128 {offsets = [0, 0], sizes = [2, 32], strides = [1, 1]} : vector<2x96xf32> to vector<2x32xf32>
    %132 = vector.extract_strided_slice %128 {offsets = [0, 32], sizes = [2, 32], strides = [1, 1]} : vector<2x96xf32> to vector<2x32xf32>
    %133 = vector.extract_strided_slice %128 {offsets = [0, 64], sizes = [2, 32], strides = [1, 1]} : vector<2x96xf32> to vector<2x32xf32>
    %134 = arith.mulf %132, %116 : vector<2x32xf32>
    %135 = arith.mulf %131, %130 : vector<2x32xf32>
    %136 = arith.addf %134, %135 : vector<2x32xf32>
    %137 = math.tanh %136 : vector<2x32xf32>
    %138 = arith.mulf %133, %137 : vector<2x32xf32>
    %cst_21 = arith.constant dense<0.000000e+00> : vector<2x128xf32>
    %139 = tpu.matmul %138, %1, %cst_21 {dimension_numbers = #tpu.dot_dimension_numbers<[1], [0], [0], [1], [0, 0, 1, 1], [], []>} : vector<2x32xf32>, vector<32x128xf32>, vector<2x128xf32> -> vector<2x128xf32>
    %140 = arith.addf %30, %139 : vector<2x128xf32>
    %141 = vector.broadcast %2 : vector<1x128xf32> to vector<2x128xf32>
    %142 = arith.addf %140, %141 : vector<2x128xf32>
    %143 = vector.extract_strided_slice %142 {offsets = [0, 0], sizes = [2, 96], strides = [1, 1]} : vector<2x128xf32> to vector<2x96xf32>
    %144 = arith.negf %143 : vector<2x96xf32>
    %145 = math.exp %144 : vector<2x96xf32>
    %cst_22 = arith.constant 1.000000e+00 : f32
    %146 = vector.broadcast %cst_22 : f32 to vector<2x96xf32>
    %147 = arith.addf %146, %145 : vector<2x96xf32>
    %148 = arith.divf %146, %147 : vector<2x96xf32>
    %149 = vector.extract_strided_slice %142 {offsets = [0, 96], sizes = [2, 32], strides = [1, 1]} : vector<2x128xf32> to vector<2x32xf32>
    %150 = math.tanh %149 : vector<2x32xf32>
    %151 = vector.extract_strided_slice %148 {offsets = [0, 0], sizes = [2, 32], strides = [1, 1]} : vector<2x96xf32> to vector<2x32xf32>
    %152 = vector.extract_strided_slice %148 {offsets = [0, 32], sizes = [2, 32], strides = [1, 1]} : vector<2x96xf32> to vector<2x32xf32>
    %153 = vector.extract_strided_slice %148 {offsets = [0, 64], sizes = [2, 32], strides = [1, 1]} : vector<2x96xf32> to vector<2x32xf32>
    %154 = arith.mulf %152, %136 : vector<2x32xf32>
    %155 = arith.mulf %151, %150 : vector<2x32xf32>
    %156 = arith.addf %154, %155 : vector<2x32xf32>
    %157 = math.tanh %156 : vector<2x32xf32>
    %158 = arith.mulf %153, %157 : vector<2x32xf32>
    %cst_23 = arith.constant dense<0.000000e+00> : vector<2x128xf32>
    %159 = tpu.matmul %158, %1, %cst_23 {dimension_numbers = #tpu.dot_dimension_numbers<[1], [0], [0], [1], [0, 0, 1, 1], [], []>} : vector<2x32xf32>, vector<32x128xf32>, vector<2x128xf32> -> vector<2x128xf32>
    %160 = arith.addf %34, %159 : vector<2x128xf32>
    %161 = vector.broadcast %2 : vector<1x128xf32> to vector<2x128xf32>
    %162 = arith.addf %160, %161 : vector<2x128xf32>
    %163 = vector.extract_strided_slice %162 {offsets = [0, 0], sizes = [2, 96], strides = [1, 1]} : vector<2x128xf32> to vector<2x96xf32>
    %164 = arith.negf %163 : vector<2x96xf32>
    %165 = math.exp %164 : vector<2x96xf32>
    %cst_24 = arith.constant 1.000000e+00 : f32
    %166 = vector.broadcast %cst_24 : f32 to vector<2x96xf32>
    %167 = arith.addf %166, %165 : vector<2x96xf32>
    %168 = arith.divf %166, %167 : vector<2x96xf32>
    %169 = vector.extract_strided_slice %162 {offsets = [0, 96], sizes = [2, 32], strides = [1, 1]} : vector<2x128xf32> to vector<2x32xf32>
    %170 = math.tanh %169 : vector<2x32xf32>
    %171 = vector.extract_strided_slice %168 {offsets = [0, 0], sizes = [2, 32], strides = [1, 1]} : vector<2x96xf32> to vector<2x32xf32>
    %172 = vector.extract_strided_slice %168 {offsets = [0, 32], sizes = [2, 32], strides = [1, 1]} : vector<2x96xf32> to vector<2x32xf32>
    %173 = vector.extract_strided_slice %168 {offsets = [0, 64], sizes = [2, 32], strides = [1, 1]} : vector<2x96xf32> to vector<2x32xf32>
    %174 = arith.mulf %172, %156 : vector<2x32xf32>
    %175 = arith.mulf %171, %170 : vector<2x32xf32>
    %176 = arith.addf %174, %175 : vector<2x32xf32>
    %177 = math.tanh %176 : vector<2x32xf32>
    %178 = arith.mulf %173, %177 : vector<2x32xf32>
    %cst_25 = arith.constant dense<0.000000e+00> : vector<2x128xf32>
    %179 = tpu.matmul %178, %1, %cst_25 {dimension_numbers = #tpu.dot_dimension_numbers<[1], [0], [0], [1], [0, 0, 1, 1], [], []>} : vector<2x32xf32>, vector<32x128xf32>, vector<2x128xf32> -> vector<2x128xf32>
    %180 = arith.addf %38, %179 : vector<2x128xf32>
    %181 = vector.broadcast %2 : vector<1x128xf32> to vector<2x128xf32>
    %182 = arith.addf %180, %181 : vector<2x128xf32>
    %183 = vector.extract_strided_slice %182 {offsets = [0, 0], sizes = [2, 96], strides = [1, 1]} : vector<2x128xf32> to vector<2x96xf32>
    %184 = arith.negf %183 : vector<2x96xf32>
    %185 = math.exp %184 : vector<2x96xf32>
    %cst_26 = arith.constant 1.000000e+00 : f32
    %186 = vector.broadcast %cst_26 : f32 to vector<2x96xf32>
    %187 = arith.addf %186, %185 : vector<2x96xf32>
    %188 = arith.divf %186, %187 : vector<2x96xf32>
    %189 = vector.extract_strided_slice %182 {offsets = [0, 96], sizes = [2, 32], strides = [1, 1]} : vector<2x128xf32> to vector<2x32xf32>
    %190 = math.tanh %189 : vector<2x32xf32>
    %191 = vector.extract_strided_slice %188 {offsets = [0, 0], sizes = [2, 32], strides = [1, 1]} : vector<2x96xf32> to vector<2x32xf32>
    %192 = vector.extract_strided_slice %188 {offsets = [0, 32], sizes = [2, 32], strides = [1, 1]} : vector<2x96xf32> to vector<2x32xf32>
    %193 = vector.extract_strided_slice %188 {offsets = [0, 64], sizes = [2, 32], strides = [1, 1]} : vector<2x96xf32> to vector<2x32xf32>
    %194 = arith.mulf %192, %176 : vector<2x32xf32>
    %195 = arith.mulf %191, %190 : vector<2x32xf32>
    %196 = arith.addf %194, %195 : vector<2x32xf32>
    %197 = math.tanh %196 : vector<2x32xf32>
    %198 = arith.mulf %193, %197 : vector<2x32xf32>
    %199 = vector.shape_cast %58 : vector<2x32xf32> to vector<2x1x32xf32>
    %200 = vector.shape_cast %78 : vector<2x32xf32> to vector<2x1x32xf32>
    %201 = vector.shape_cast %98 : vector<2x32xf32> to vector<2x1x32xf32>
    %202 = vector.shape_cast %118 : vector<2x32xf32> to vector<2x1x32xf32>
    %203 = vector.shape_cast %138 : vector<2x32xf32> to vector<2x1x32xf32>
    %204 = vector.shape_cast %158 : vector<2x32xf32> to vector<2x1x32xf32>
    %205 = vector.shape_cast %178 : vector<2x32xf32> to vector<2x1x32xf32>
    %206 = vector.shape_cast %198 : vector<2x32xf32> to vector<2x1x32xf32>
    %207 = tpu.concatenate %199, %200, %201, %202, %203, %204, %205, %206 in 1 : vector<2x1x32xf32>, vector<2x1x32xf32>, vector<2x1x32xf32>, vector<2x1x32xf32>, vector<2x1x32xf32>, vector<2x1x32xf32>, vector<2x1x32xf32>, vector<2x1x32xf32> -> vector<2x8x32xf32>
    %208 = vector.shape_cast %3 : vector<1x32xf32> to vector<1x1x32xf32>
    %209 = vector.broadcast %208 : vector<1x1x32xf32> to vector<2x8x32xf32>
    %210 = arith.mulf %207, %209 : vector<2x8x32xf32>
    %cst_27 = arith.constant dense<0.000000e+00> : vector<2x8xf32>
    %211 = vector.multi_reduction <add>, %210, %cst_27 [2] : vector<2x8x32xf32> to vector<2x8xf32>
    %212 = vector.broadcast %4 : vector<1x1xf32> to vector<2x8xf32>
    %213 = arith.addf %211, %212 : vector<2x8xf32>
    %214 = vector.broadcast %3 : vector<1x32xf32> to vector<2x32xf32>
    %215 = arith.mulf %198, %214 : vector<2x32xf32>
    %cst_28 = arith.constant dense<0.000000e+00> : vector<2xf32>
    %216 = vector.multi_reduction <add>, %215, %cst_28 [1] : vector<2x32xf32> to vector<2xf32>
    %217 = vector.shape_cast %216 : vector<2xf32> to vector<2x1xf32>
    %218 = vector.broadcast %4 : vector<1x1xf32> to vector<2x1xf32>
    %219 = arith.addf %217, %218 : vector<2x1xf32>
    %220 = vector.broadcast %219 : vector<2x1xf32> to vector<2x128xf32>
    %221 = vector.broadcast %0 : vector<1x128xf32> to vector<2x128xf32>
    %222 = arith.mulf %220, %221 : vector<2x128xf32>
    %cst_29 = arith.constant dense<0.000000e+00> : vector<2x128xf32>
    %223 = tpu.matmul %198, %1, %cst_29 {dimension_numbers = #tpu.dot_dimension_numbers<[1], [0], [0], [1], [0, 0, 1, 1], [], []>} : vector<2x32xf32>, vector<32x128xf32>, vector<2x128xf32> -> vector<2x128xf32>
    %224 = arith.addf %222, %223 : vector<2x128xf32>
    %225 = vector.broadcast %2 : vector<1x128xf32> to vector<2x128xf32>
    %226 = arith.addf %224, %225 : vector<2x128xf32>
    %227 = vector.extract_strided_slice %226 {offsets = [0, 0], sizes = [2, 96], strides = [1, 1]} : vector<2x128xf32> to vector<2x96xf32>
    %228 = arith.negf %227 : vector<2x96xf32>
    %229 = math.exp %228 : vector<2x96xf32>
    %cst_30 = arith.constant 1.000000e+00 : f32
    %230 = vector.broadcast %cst_30 : f32 to vector<2x96xf32>
    %231 = arith.addf %230, %229 : vector<2x96xf32>
    %232 = arith.divf %230, %231 : vector<2x96xf32>
    %233 = vector.extract_strided_slice %226 {offsets = [0, 96], sizes = [2, 32], strides = [1, 1]} : vector<2x128xf32> to vector<2x32xf32>
    %234 = math.tanh %233 : vector<2x32xf32>
    %235 = vector.extract_strided_slice %232 {offsets = [0, 0], sizes = [2, 32], strides = [1, 1]} : vector<2x96xf32> to vector<2x32xf32>
    %236 = vector.extract_strided_slice %232 {offsets = [0, 32], sizes = [2, 32], strides = [1, 1]} : vector<2x96xf32> to vector<2x32xf32>
    %237 = vector.extract_strided_slice %232 {offsets = [0, 64], sizes = [2, 32], strides = [1, 1]} : vector<2x96xf32> to vector<2x32xf32>
    %238 = arith.mulf %236, %196 : vector<2x32xf32>
    %239 = arith.mulf %235, %234 : vector<2x32xf32>
    %240 = arith.addf %238, %239 : vector<2x32xf32>
    %241 = math.tanh %240 : vector<2x32xf32>
    %242 = arith.mulf %237, %241 : vector<2x32xf32>
    %243 = vector.broadcast %3 : vector<1x32xf32> to vector<2x32xf32>
    %244 = arith.mulf %242, %243 : vector<2x32xf32>
    %cst_31 = arith.constant dense<0.000000e+00> : vector<2xf32>
    %245 = vector.multi_reduction <add>, %244, %cst_31 [1] : vector<2x32xf32> to vector<2xf32>
    %246 = vector.shape_cast %245 : vector<2xf32> to vector<2x1xf32>
    %247 = vector.broadcast %4 : vector<1x1xf32> to vector<2x1xf32>
    %248 = arith.addf %246, %247 : vector<2x1xf32>
    %249 = vector.broadcast %248 : vector<2x1xf32> to vector<2x128xf32>
    %250 = vector.broadcast %0 : vector<1x128xf32> to vector<2x128xf32>
    %251 = arith.mulf %249, %250 : vector<2x128xf32>
    %cst_32 = arith.constant dense<0.000000e+00> : vector<2x128xf32>
    %252 = tpu.matmul %242, %1, %cst_32 {dimension_numbers = #tpu.dot_dimension_numbers<[1], [0], [0], [1], [0, 0, 1, 1], [], []>} : vector<2x32xf32>, vector<32x128xf32>, vector<2x128xf32> -> vector<2x128xf32>
    %253 = arith.addf %251, %252 : vector<2x128xf32>
    %254 = vector.broadcast %2 : vector<1x128xf32> to vector<2x128xf32>
    %255 = arith.addf %253, %254 : vector<2x128xf32>
    %256 = vector.extract_strided_slice %255 {offsets = [0, 0], sizes = [2, 96], strides = [1, 1]} : vector<2x128xf32> to vector<2x96xf32>
    %257 = arith.negf %256 : vector<2x96xf32>
    %258 = math.exp %257 : vector<2x96xf32>
    %cst_33 = arith.constant 1.000000e+00 : f32
    %259 = vector.broadcast %cst_33 : f32 to vector<2x96xf32>
    %260 = arith.addf %259, %258 : vector<2x96xf32>
    %261 = arith.divf %259, %260 : vector<2x96xf32>
    %262 = vector.extract_strided_slice %255 {offsets = [0, 96], sizes = [2, 32], strides = [1, 1]} : vector<2x128xf32> to vector<2x32xf32>
    %263 = math.tanh %262 : vector<2x32xf32>
    %264 = vector.extract_strided_slice %261 {offsets = [0, 0], sizes = [2, 32], strides = [1, 1]} : vector<2x96xf32> to vector<2x32xf32>
    %265 = vector.extract_strided_slice %261 {offsets = [0, 32], sizes = [2, 32], strides = [1, 1]} : vector<2x96xf32> to vector<2x32xf32>
    %266 = vector.extract_strided_slice %261 {offsets = [0, 64], sizes = [2, 32], strides = [1, 1]} : vector<2x96xf32> to vector<2x32xf32>
    %267 = arith.mulf %265, %240 : vector<2x32xf32>
    %268 = arith.mulf %264, %263 : vector<2x32xf32>
    %269 = arith.addf %267, %268 : vector<2x32xf32>
    %270 = math.tanh %269 : vector<2x32xf32>
    %271 = arith.mulf %266, %270 : vector<2x32xf32>
    %272 = vector.broadcast %3 : vector<1x32xf32> to vector<2x32xf32>
    %273 = arith.mulf %271, %272 : vector<2x32xf32>
    %cst_34 = arith.constant dense<0.000000e+00> : vector<2xf32>
    %274 = vector.multi_reduction <add>, %273, %cst_34 [1] : vector<2x32xf32> to vector<2xf32>
    %275 = vector.shape_cast %274 : vector<2xf32> to vector<2x1xf32>
    %276 = vector.broadcast %4 : vector<1x1xf32> to vector<2x1xf32>
    %277 = arith.addf %275, %276 : vector<2x1xf32>
    %278 = tpu.concatenate %213, %248, %277 in 1 : vector<2x8xf32>, vector<2x1xf32>, vector<2x1xf32> -> vector<2x10xf32>
    %c0_35 = arith.constant 0 : index
    %c0_36 = arith.constant 0 : index
    %279 = vector.load %arg6[%c0_35, %c0_36] : memref<2x10xf32, #tpu.memory_space<vmem>>, vector<2x10xf32>
    tpu.vector_store %arg6[%c0_35, %c0_36], %278 {strides = array<i32>} : memref<2x10xf32, #tpu.memory_space<vmem>>, vector<2x10xf32>,
    return
  }
}

</mosaic_0001>

<llo_original>
// kernel: tpu_custom_call.1
$region0: #{tpu_custom_call.1}
  #allocation0 [shape = 'u32[]', space=smem, size = 0x4, offset = 0x4, fixed_abs, tag = 'smem constant byte address 0x4 - core index']
  #allocation1 [shape = 'u32[144,128]{1,0:T(1,128)}', space=vmem, size = 0x12000, scoped, tag = 'internal scratch']
  #allocation2 [shape = 'f32[1,1]{1,0:T(1,128)S(1)}', space=vmem, size = 0x200, scoped, tag = 'scoped memory for tpu_custom_call.1']
  %s0 = inlined_call_operand.vmem [shape: f32[2,8], index: 0, kind: input, shape index: {}]
  %s1 = inlined_call_operand.vmem [shape: f32[1,128], index: 1, kind: input, shape index: {}]
  %s2 = inlined_call_operand.hbm [shape: f32[32,128], index: 2, kind: input, shape index: {}]
  %s3 = inlined_call_operand.vmem [shape: f32[1,128], index: 3, kind: input, shape index: {}]
  %s4 = inlined_call_operand.vmem [shape: f32[1,32], index: 4, kind: input, shape index: {}]
  %s5 = inlined_call_operand.<no memory space> [shape: f32[1,1], index: 5, kind: input, shape index: {}]
  %s6 = inlined_call_operand.hbm [shape: f32[2,10], index: 6, kind: output, shape index: {}]
  %s7 = sld [smem:[#allocation0]]
  $region38: #{tpu_custom_call.1} parent=0
    _
  %s9 = ssub.s32 1, %s7
  %s10 = scalar_select 0, %s9, %s7
  %v11 = vstv %s5
  %12 = vst [vmem:[#allocation2] sm:$0x1] %v11
  $region1: #{tpu_custom_call.1} parent=0
    #allocation3 [shape = 'u8[16384]{0}', space=vmem, size = 0x4000, scoped, tag = 'input window, operand 2, single buffered']
    #allocation4 [shape = 's32[1]{0}', space=sflag, size = 0x4, scoped, tag = 'scoped memory for tpu_custom_call.1']
    #allocation5 [shape = 's32[1]{0}', space=sflag, size = 0x4, scoped, tag = 'scoped memory for tpu_custom_call.1']
    #allocation6 [shape = 'u8[1024]{0}', space=vmem, size = 0x400, scoped, tag = 'output window, operand 0, single buffered']
    %13 = vsyncpa [#allocation4], 0
    %14 = vsyncpa [#allocation5], 0
    // Predicated region
    $region2: #{tpu_custom_call.1} parent=1 // pred_check
      _
    $region3: #{tpu_custom_call.1} parent=1 // pred_check_branch
      %16 = sbr.rel (0) target = $region5
    $region4: #{tpu_custom_call.1} parent=1 // pred_region
      _
    $region5: #{tpu_custom_call.1} parent=1 // pred_fallthru
      _
    // Predicated region
    $region6: #{tpu_custom_call.1} parent=1 // pred_check
      _
    $region7: #{tpu_custom_call.1} parent=1 // pred_check_branch
      %18 = sbr.rel (0) target = $region9
    $region8: #{tpu_custom_call.1} parent=1 // pred_region
      _
    $region9: #{tpu_custom_call.1} parent=1 // pred_fallthru
      _
    // Predicated region
    $region10: #{tpu_custom_call.1} parent=1 // pred_check
      _
    $region11: #{tpu_custom_call.1} parent=1 // pred_check_branch
      %20 = sbr.rel (0) target = $region13
    $region12: #{tpu_custom_call.1} parent=1 // pred_region
      %s22 = ssub.s32 512, 512
      %23 = vsyncadd [#allocation4], %s22
      %s24 = sshll.u32 [#allocation3], 4
      %s25 = int_to_ptr.vmem [resolvable:$true] %s24
      %30 = dma.hbm_to_vmem [thread:$0]  %s2, 512, %s25, [#allocation4], 128, 128, 8
    $region13: #{tpu_custom_call.1} parent=1 // pred_fallthru
      _
    // Predicated region
    $region14: #{tpu_custom_call.1} parent=1 // pred_check
      _
    $region15: #{tpu_custom_call.1} parent=1 // pred_check_branch
      %32 = sbr.rel (0) target = $region17
    $region16: #{tpu_custom_call.1} parent=1 // pred_region
      _
    $region17: #{tpu_custom_call.1} parent=1 // pred_fallthru
      _
    // Predicated region
    $region18: #{tpu_custom_call.1} parent=1 // pred_check
      _
    $region19: #{tpu_custom_call.1} parent=1 // pred_check_branch
      %34 = sbr.rel (0) target = $region21
    $region20: #{tpu_custom_call.1} parent=1 // pred_region
      _
    $region21: #{tpu_custom_call.1} parent=1 // pred_fallthru
      _
    // Predicated region
    $region22: #{tpu_custom_call.1} parent=1 // pred_check
      _
    $region23: #{tpu_custom_call.1} parent=1 // pred_check_branch
      %36 = sbr.rel (0) target = $region25
    $region24: #{tpu_custom_call.1} parent=1 // pred_region
      _
    $region25: #{tpu_custom_call.1} parent=1 // pred_fallthru
      _
    // Predicated region
    $region26: #{tpu_custom_call.1} parent=1 // pred_check
      _
    $region27: #{tpu_custom_call.1} parent=1 // pred_check_branch
      %38 = sbr.rel (0) target = $region29
    $region28: #{tpu_custom_call.1} parent=1 // pred_region
      %39 = dma.done [#allocation4], 512
    $region29: #{tpu_custom_call.1} parent=1 // pred_fallthru
      _
    %v40 = vld [vmem:[%s1] sm:$0x1]
    %v41 = vld [vmem:[#allocation3] sm:$0xff]
    %v42 = vld [vmem:[#allocation3 + $0x8] sm:$0xff]
    %v43 = vld [vmem:[#allocation3 + $0x10] sm:$0xff]
    %v44 = vld [vmem:[#allocation3 + $0x18] sm:$0xff]
    %v45 = vld [vmem:[%s3] sm:$0x1]
    %v46 = vld [vmem:[%s4] sm:$0x1]
    %v47 = vld [vmem:[#allocation2] sm:$0x1]
    %v48 = vld [vmem:[%s0] sm:$0x3]
    %50 = vset.pattern.permute.xlu0 0
    %51 = vperm.xlu0 %50, %v48
    %v52 = vpop.permute.xlu0 %51
    %v55 = vlaneseq
    %v56 = vshrl.u32 %v55, 7
    %v57 = vsub.s32 0, %v56
    %v58 = vrot.slane %v40, %v57
    %v60 = vmul.f32 %v52, %v58
    %61 = vset.pattern.permute.xlu0 1
    %62 = vperm.xlu0 %61, %v48
    %v63 = vpop.permute.xlu0 %62
    %v65 = vmul.f32 %v63, %v58
    %66 = vset.pattern.permute.xlu0 2
    %67 = vperm.xlu0 %66, %v48
    %v68 = vpop.permute.xlu0 %67
    %v70 = vmul.f32 %v68, %v58
    %71 = vset.pattern.permute.xlu0 3
    %72 = vperm.xlu0 %71, %v48
    %v73 = vpop.permute.xlu0 %72
    %v75 = vmul.f32 %v73, %v58
    %76 = vset.pattern.permute.xlu0 4
    %77 = vperm.xlu0 %76, %v48
    %v78 = vpop.permute.xlu0 %77
    %v80 = vmul.f32 %v78, %v58
    %81 = vset.pattern.permute.xlu0 5
    %82 = vperm.xlu0 %81, %v48
    %v83 = vpop.permute.xlu0 %82
    %v85 = vmul.f32 %v83, %v58
    %86 = vset.pattern.permute.xlu0 6
    %87 = vperm.xlu0 %86, %v48
    %v88 = vpop.permute.xlu0 %87
    %v90 = vmul.f32 %v88, %v58
    %91 = vset.pattern.permute.xlu0 7
    %92 = vperm.xlu0 %91, %v48
    %v93 = vpop.permute.xlu0 %92
    %v95 = vmul.f32 %v93, %v58
    %vm96 = vcmask 261120
    %v98 = vsel %vm96, 0.0, 0
    %100 = vmatprep.subr.mxu0 0.0
    %101 = vmatpush1.msra.mxu0 %v41
    %102 = vmatprep.subr.mxu0 0.0
    %103 = vmatpush1.msra.mxu0 %v42
    %104 = vmatprep.subr.mxu0 0.0
    %105 = vmatpush1.msra.mxu0 %v43
    %106 = vmatprep.subr.mxu0 0.0
    %107 = vmatpush1.msra.mxu0 %v44
    %108 = vmatprep.subr.mxu0 0.0
    %109 = vmatpush1.msra.mxu0 0.0
    %110 = vmatprep.subr.mxu0 0.0
    %111 = vmatpush1.msra.mxu0 0.0
    %112 = vmatprep.subr.mxu0 0.0
    %113 = vmatpush1.msra.mxu0 0.0
    %114 = vmatprep.subr.mxu0 0.0
    %115 = vmatpush1.msra.mxu0 0.0
    %116 = vmatprep.subr.mxu0 0.0
    %117 = vmatpush1.msra.mxu0 0.0
    %118 = vmatprep.subr.mxu0 0.0
    %119 = vmatpush1.msra.mxu0 0.0
    %120 = vmatprep.subr.mxu0 0.0
    %121 = vmatpush1.msra.mxu0 0.0
    %122 = vmatprep.subr.mxu0 0.0
    %123 = vmatpush1.msra.mxu0 0.0
    %124 = vmatprep.subr.mxu0 0.0
    %125 = vmatpush1.msra.mxu0 0.0
    %126 = vmatprep.subr.mxu0 0.0
    %127 = vmatpush1.msra.mxu0 0.0
    %128 = vmatprep.subr.mxu0 0.0
    %129 = vmatpush1.msra.mxu0 0.0
    %130 = vmatprep.subr.mxu0 0.0
    %131 = vmatpush1.msra.mxu0 0.0
    %132 = vmatprep.subr.mxu0 0.0
    %133 = vmatpush1.msra.mxu0 0.0
    %134 = vmatprep.subr.mxu0 0.0
    %135 = vmatpush1.msra.mxu0 0.0
    %136 = vmatprep.subr.mxu0 0.0
    %137 = vmatpush1.msra.mxu0 0.0
    %138 = vmatprep.subr.mxu0 0.0
    %139 = vmatpush1.msra.mxu0 0.0
    %140 = vmatprep.subr.mxu0 0.0
    %141 = vmatpush1.msra.mxu0 0.0
    %142 = vmatprep.subr.mxu0 0.0
    %143 = vmatpush1.msra.mxu0 0.0
    %144 = vmatprep.subr.mxu0 0.0
    %145 = vmatpush1.msra.mxu0 0.0
    %146 = vmatprep.subr.mxu0 0.0
    %147 = vmatpush1.msra.mxu0 0.0
    %148 = vmatprep.subr.mxu0 0.0
    %149 = vmatpush1.msra.mxu0 0.0
    %150 = vmatprep.subr.mxu0 0.0
    %151 = vmatpush1.msra.mxu0 0.0
    %152 = vmatprep.subr.mxu0 0.0
    %153 = vmatpush1.msra.mxu0 0.0
    %154 = vmatprep.subr.mxu0 0.0
    %155 = vmatpush1.msra.mxu0 0.0
    %156 = vmatprep.subr.mxu0 0.0
    %157 = vmatpush1.msra.mxu0 0.0
    %158 = vmatprep.subr.mxu0 0.0
    %159 = vmatpush1.msra.mxu0 0.0
    %160 = vmatprep.subr.mxu0 0.0
    %161 = vmatpush1.msra.mxu0 0.0
    %162 = vmatprep.subr.mxu0 0.0
    %163 = vmatpush1.msra.mxu0 0.0
    %164 = vmatprep.mubr.f32.mxu0 0.0
    %165 = vmatmul.mubr.f32.gmra.mrb[0].mxu0 %v98
    %v166 = vpop.f32.mrb[0].mxu0
    %v167 = vadd.f32 0.0, %v166
    %v168 = vpop.f32.mrb[0].mxu0
    %169 = vdwg.mxu0
    %v170 = vadd.f32 %v60, %v167
    %v172 = vlaneseq
    %v173 = vshrl.u32 %v172, 7
    %v174 = vsub.s32 0, %v173
    %v175 = vrot.slane %v45, %v174
    %v177 = vadd.f32 %v170, %v175
    %v178 = vxor.u32 %v177, 2147483648
    %v179 = vmul.f32 %v178, 1.442695
    %v180 = vpow.pop %v179
    %v181 = vadd.f32 %v180, 1.0
    %v182 = vrcp.pop %v181
    %v183 = vmul.f32 1.0, %v182
    %v184 = vtanh.pop %v177
    %v185 = vmul.f32 %v183, 0.0
    %187 = vrot.lane.b32.xlu0 %v184, 32
    %v188 = vpop.permute.xlu0 %187
    %v190 = vmul.f32 %v183, %v188
    %192 = vrot.lane.b32.xlu0 %v190, 32
    %v193 = vpop.permute.xlu0 %192
    %v195 = vadd.f32 %v185, %v193
    %v196 = vtanh.pop %v195
    %198 = vrot.lane.b32.xlu0 %v196, 32
    %v199 = vpop.permute.xlu0 %198
    %v201 = vmul.f32 %v183, %v199
    %203 = vrot.lane.b32.xlu0 %v201, 64
    %v204 = vpop.permute.xlu0 %203
    %v205 = vsel %vm96, %v204, 0
    %207 = vmatprep.subr.mxu0 0.0
    %208 = vmatpush1.msra.mxu0 %v41
    %209 = vmatprep.subr.mxu0 0.0
    %210 = vmatpush1.msra.mxu0 %v42
    %211 = vmatprep.subr.mxu0 0.0
    %212 = vmatpush1.msra.mxu0 %v43
    %213 = vmatprep.subr.mxu0 0.0
    %214 = vmatpush1.msra.mxu0 %v44
    %215 = vmatprep.subr.mxu0 0.0
    %216 = vmatpush1.msra.mxu0 0.0
    %217 = vmatprep.subr.mxu0 0.0
    %218 = vmatpush1.msra.mxu0 0.0
    %219 = vmatprep.subr.mxu0 0.0
    %220 = vmatpush1.msra.mxu0 0.0
    %221 = vmatprep.subr.mxu0 0.0
    %222 = vmatpush1.msra.mxu0 0.0
    %223 = vmatprep.subr.mxu0 0.0
    %224 = vmatpush1.msra.mxu0 0.0
    %225 = vmatprep.subr.mxu0 0.0
    %226 = vmatpush1.msra.mxu0 0.0
    %227 = vmatprep.subr.mxu0 0.0
    %228 = vmatpush1.msra.mxu0 0.0
    %229 = vmatprep.subr.mxu0 0.0
    %230 = vmatpush1.msra.mxu0 0.0
    %231 = vmatprep.subr.mxu0 0.0
    %232 = vmatpush1.msra.mxu0 0.0
    %233 = vmatprep.subr.mxu0 0.0
    %234 = vmatpush1.msra.mxu0 0.0
    %235 = vmatprep.subr.mxu0 0.0
    %236 = vmatpush1.msra.mxu0 0.0
    %237 = vmatprep.subr.mxu0 0.0
    %238 = vmatpush1.msra.mxu0 0.0
    %239 = vmatprep.subr.mxu0 0.0
    %240 = vmatpush1.msra.mxu0 0.0
    %241 = vmatprep.subr.mxu0 0.0
    %242 = vmatpush1.msra.mxu0 0.0
    %243 = vmatprep.subr.mxu0 0.0
    %244 = vmatpush1.msra.mxu0 0.0
    %245 = vmatprep.subr.mxu0 0.0
    %246 = vmatpush1.msra.mxu0 0.0
    %247 = vmatprep.subr.mxu0 0.0
    %248 = vmatpush1.msra.mxu0 0.0
    %249 = vmatprep.subr.mxu0 0.0
    %250 = vmatpush1.msra.mxu0 0.0
    %251 = vmatprep.subr.mxu0 0.0
    %252 = vmatpush1.msra.mxu0 0.0
    %253 = vmatprep.subr.mxu0 0.0
    %254 = vmatpush1.msra.mxu0 0.0
    %255 = vmatprep.subr.mxu0 0.0
    %256 = vmatpush1.msra.mxu0 0.0
    %257 = vmatprep.subr.mxu0 0.0
    %258 = vmatpush1.msra.mxu0 0.0
    %259 = vmatprep.subr.mxu0 0.0
    %260 = vmatpush1.msra.mxu0 0.0
    %261 = vmatprep.subr.mxu0 0.0
    %262 = vmatpush1.msra.mxu0 0.0
    %263 = vmatprep.subr.mxu0 0.0
    %264 = vmatpush1.msra.mxu0 0.0
    %265 = vmatprep.subr.mxu0 0.0
    %266 = vmatpush1.msra.mxu0 0.0
    %267 = vmatprep.subr.mxu0 0.0
    %268 = vmatpush1.msra.mxu0 0.0
    %269 = vmatprep.subr.mxu0 0.0
    %270 = vmatpush1.msra.mxu0 0.0
    %271 = vmatprep.mubr.f32.mxu0 0.0
    %272 = vmatmul.mubr.f32.gmra.mrb[0].mxu0 %v205
    %v273 = vpop.f32.mrb[0].mxu0
    %v274 = vadd.f32 0.0, %v273
    %v275 = vpop.f32.mrb[0].mxu0
    %276 = vdwg.mxu0
    %v277 = vadd.f32 %v65, %v274
    %v278 = vadd.f32 %v277, %v175
    %v279 = vxor.u32 %v278, 2147483648
    %v280 = vmul.f32 %v279, 1.442695
    %v281 = vpow.pop %v280
    %v282 = vadd.f32 %v281, 1.0
    %v283 = vrcp.pop %v282
    %v284 = vmul.f32 1.0, %v283
    %v285 = vtanh.pop %v278
    %v286 = vmul.f32 %v284, %v195
    %288 = vrot.lane.b32.xlu0 %v285, 32
    %v289 = vpop.permute.xlu0 %288
    %v291 = vmul.f32 %v284, %v289
    %293 = vrot.lane.b32.xlu0 %v291, 32
    %v294 = vpop.permute.xlu0 %293
    %v296 = vadd.f32 %v286, %v294
    %v297 = vtanh.pop %v296
    %299 = vrot.lane.b32.xlu0 %v297, 32
    %v300 = vpop.permute.xlu0 %299
    %v302 = vmul.f32 %v284, %v300
    %304 = vrot.lane.b32.xlu0 %v302, 64
    %v305 = vpop.permute.xlu0 %304
    %v306 = vsel %vm96, %v305, 0
    %308 = vmatprep.subr.mxu0 0.0
    %309 = vmatpush1.msra.mxu0 %v41
    %310 = vmatprep.subr.mxu0 0.0
    %311 = vmatpush1.msra.mxu0 %v42
    %312 = vmatprep.subr.mxu0 0.0
    %313 = vmatpush1.msra.mxu0 %v43
    %314 = vmatprep.subr.mxu0 0.0
    %315 = vmatpush1.msra.mxu0 %v44
    %316 = vmatprep.subr.mxu0 0.0
    %317 = vmatpush1.msra.mxu0 0.0
    %318 = vmatprep.subr.mxu0 0.0
    %319 = vmatpush1.msra.mxu0 0.0
    %320 = vmatprep.subr.mxu0 0.0
    %321 = vmatpush1.msra.mxu0 0.0
    %322 = vmatprep.subr.mxu0 0.0
    %323 = vmatpush1.msra.mxu0 0.0
    %324 = vmatprep.subr.mxu0 0.0
    %325 = vmatpush1.msra.mxu0 0.0
    %326 = vmatprep.subr.mxu0 0.0
    %327 = vmatpush1.msra.mxu0 0.0
    %328 = vmatprep.subr.mxu0 0.0
    %329 = vmatpush1.msra.mxu0 0.0
    %330 = vmatprep.subr.mxu0 0.0
    %331 = vmatpush1.msra.mxu0 0.0
    %332 = vmatprep.subr.mxu0 0.0
    %333 = vmatpush1.msra.mxu0 0.0
    %334 = vmatprep.subr.mxu0 0.0
    %335 = vmatpush1.msra.mxu0 0.0
    %336 = vmatprep.subr.mxu0 0.0
    %337 = vmatpush1.msra.mxu0 0.0
    %338 = vmatprep.subr.mxu0 0.0
    %339 = vmatpush1.msra.mxu0 0.0
    %340 = vmatprep.subr.mxu0 0.0
    %341 = vmatpush1.msra.mxu0 0.0
    %342 = vmatprep.subr.mxu0 0.0
    %343 = vmatpush1.msra.mxu0 0.0
    %344 = vmatprep.subr.mxu0 0.0
    %345 = vmatpush1.msra.mxu0 0.0
    %346 = vmatprep.subr.mxu0 0.0
    %347 = vmatpush1.msra.mxu0 0.0
    %348 = vmatprep.subr.mxu0 0.0
    %349 = vmatpush1.msra.mxu0 0.0
    %350 = vmatprep.subr.mxu0 0.0
    %351 = vmatpush1.msra.mxu0 0.0
    %352 = vmatprep.subr.mxu0 0.0
    %353 = vmatpush1.msra.mxu0 0.0
    %354 = vmatprep.subr.mxu0 0.0
    %355 = vmatpush1.msra.mxu0 0.0
    %356 = vmatprep.subr.mxu0 0.0
    %357 = vmatpush1.msra.mxu0 0.0
    %358 = vmatprep.subr.mxu0 0.0
    %359 = vmatpush1.msra.mxu0 0.0
    %360 = vmatprep.subr.mxu0 0.0
    %361 = vmatpush1.msra.mxu0 0.0
    %362 = vmatprep.subr.mxu0 0.0
    %363 = vmatpush1.msra.mxu0 0.0
    %364 = vmatprep.subr.mxu0 0.0
    %365 = vmatpush1.msra.mxu0 0.0
    %366 = vmatprep.subr.mxu0 0.0
    %367 = vmatpush1.msra.mxu0 0.0
    %368 = vmatprep.subr.mxu0 0.0
    %369 = vmatpush1.msra.mxu0 0.0
    %370 = vmatprep.subr.mxu0 0.0
    %371 = vmatpush1.msra.mxu0 0.0
    %372 = vmatprep.mubr.f32.mxu0 0.0
    %373 = vmatmul.mubr.f32.gmra.mrb[0].mxu0 %v306
    %v374 = vpop.f32.mrb[0].mxu0
    %v375 = vadd.f32 0.0, %v374
    %v376 = vpop.f32.mrb[0].mxu0
    %377 = vdwg.mxu0
    %v378 = vadd.f32 %v70, %v375
    %v379 = vadd.f32 %v378, %v175
    %v380 = vxor.u32 %v379, 2147483648
    %v381 = vmul.f32 %v380, 1.442695
    %v382 = vpow.pop %v381
    %v383 = vadd.f32 %v382, 1.0
    %v384 = vrcp.pop %v383
    %v385 = vmul.f32 1.0, %v384
    %v386 = vtanh.pop %v379
    %v387 = vmul.f32 %v385, %v296
    %389 = vrot.lane.b32.xlu0 %v386, 32
    %v390 = vpop.permute.xlu0 %389
    %v392 = vmul.f32 %v385, %v390
    %394 = vrot.lane.b32.xlu0 %v392, 32
    %v395 = vpop.permute.xlu0 %394
    %v397 = vadd.f32 %v387, %v395
    %v398 = vtanh.pop %v397
    %400 = vrot.lane.b32.xlu0 %v398, 32
    %v401 = vpop.permute.xlu0 %400
    %v403 = vmul.f32 %v385, %v401
    %405 = vrot.lane.b32.xlu0 %v403, 64
    %v406 = vpop.permute.xlu0 %405
    %v407 = vsel %vm96, %v406, 0
    %409 = vmatprep.subr.mxu0 0.0
    %410 = vmatpush1.msra.mxu0 %v41
    %411 = vmatprep.subr.mxu0 0.0
    %412 = vmatpush1.msra.mxu0 %v42
    %413 = vmatprep.subr.mxu0 0.0
    %414 = vmatpush1.msra.mxu0 %v43
    %415 = vmatprep.subr.mxu0 0.0
    %416 = vmatpush1.msra.mxu0 %v44
    %417 = vmatprep.subr.mxu0 0.0
    %418 = vmatpush1.msra.mxu0 0.0
    %419 = vmatprep.subr.mxu0 0.0
    %420 = vmatpush1.msra.mxu0 0.0
    %421 = vmatprep.subr.mxu0 0.0
    %422 = vmatpush1.msra.mxu0 0.0
    %423 = vmatprep.subr.mxu0 0.0
    %424 = vmatpush1.msra.mxu0 0.0
    %425 = vmatprep.subr.mxu0 0.0
    %426 = vmatpush1.msra.mxu0 0.0
    %427 = vmatprep.subr.mxu0 0.0
    %428 = vmatpush1.msra.mxu0 0.0
    %429 = vmatprep.subr.mxu0 0.0
    %430 = vmatpush1.msra.mxu0 0.0
    %431 = vmatprep.subr.mxu0 0.0
    %432 = vmatpush1.msra.mxu0 0.0
    %433 = vmatprep.subr.mxu0 0.0
    %434 = vmatpush1.msra.mxu0 0.0
    %435 = vmatprep.subr.mxu0 0.0
    %436 = vmatpush1.msra.mxu0 0.0
    %437 = vmatprep.subr.mxu0 0.0
    %438 = vmatpush1.msra.mxu0 0.0
    %439 = vmatprep.subr.mxu0 0.0
    %440 = vmatpush1.msra.mxu0 0.0
    %441 = vmatprep.subr.mxu0 0.0
    %442 = vmatpush1.msra.mxu0 0.0
    %443 = vmatprep.subr.mxu0 0.0
    %444 = vmatpush1.msra.mxu0 0.0
    %445 = vmatprep.subr.mxu0 0.0
    %446 = vmatpush1.msra.mxu0 0.0
    %447 = vmatprep.subr.mxu0 0.0
    %448 = vmatpush1.msra.mxu0 0.0
    %449 = vmatprep.subr.mxu0 0.0
    %450 = vmatpush1.msra.mxu0 0.0
    %451 = vmatprep.subr.mxu0 0.0
    %452 = vmatpush1.msra.mxu0 0.0
    %453 = vmatprep.subr.mxu0 0.0
    %454 = vmatpush1.msra.mxu0 0.0
    %455 = vmatprep.subr.mxu0 0.0
    %456 = vmatpush1.msra.mxu0 0.0
    %457 = vmatprep.subr.mxu0 0.0
    %458 = vmatpush1.msra.mxu0 0.0
    %459 = vmatprep.subr.mxu0 0.0
    %460 = vmatpush1.msra.mxu0 0.0
    %461 = vmatprep.subr.mxu0 0.0
    %462 = vmatpush1.msra.mxu0 0.0
    %463 = vmatprep.subr.mxu0 0.0
    %464 = vmatpush1.msra.mxu0 0.0
    %465 = vmatprep.subr.mxu0 0.0
    %466 = vmatpush1.msra.mxu0 0.0
    %467 = vmatprep.subr.mxu0 0.0
    %468 = vmatpush1.msra.mxu0 0.0
    %469 = vmatprep.subr.mxu0 0.0
    %470 = vmatpush1.msra.mxu0 0.0
    %471 = vmatprep.subr.mxu0 0.0
    %472 = vmatpush1.msra.mxu0 0.0
    %473 = vmatprep.mubr.f32.mxu0 0.0
    %474 = vmatmul.mubr.f32.gmra.mrb[0].mxu0 %v407
    %v475 = vpop.f32.mrb[0].mxu0
    %v476 = vadd.f32 0.0, %v475
    %v477 = vpop.f32.mrb[0].mxu0
    %478 = vdwg.mxu0
    %v479 = vadd.f32 %v75, %v476
    %v480 = vadd.f32 %v479, %v175
    %v481 = vxor.u32 %v480, 2147483648
    %v482 = vmul.f32 %v481, 1.442695
    %v483 = vpow.pop %v482
    %v484 = vadd.f32 %v483, 1.0
    %v485 = vrcp.pop %v484
    %v486 = vmul.f32 1.0, %v485
    %v487 = vtanh.pop %v480
    %v488 = vmul.f32 %v486, %v397
    %490 = vrot.lane.b32.xlu0 %v487, 32
    %v491 = vpop.permute.xlu0 %490
    %v493 = vmul.f32 %v486, %v491
    %495 = vrot.lane.b32.xlu0 %v493, 32
    %v496 = vpop.permute.xlu0 %495
    %v498 = vadd.f32 %v488, %v496
    %v499 = vtanh.pop %v498
    %501 = vrot.lane.b32.xlu0 %v499, 32
    %v502 = vpop.permute.xlu0 %501
    %v504 = vmul.f32 %v486, %v502
    %506 = vrot.lane.b32.xlu0 %v504, 64
    %v507 = vpop.permute.xlu0 %506
    %v508 = vsel %vm96, %v507, 0
    %510 = vmatprep.subr.mxu0 0.0
    %511 = vmatpush1.msra.mxu0 %v41
    %512 = vmatprep.subr.mxu0 0.0
    %513 = vmatpush1.msra.mxu0 %v42
    %514 = vmatprep.subr.mxu0 0.0
    %515 = vmatpush1.msra.mxu0 %v43
    %516 = vmatprep.subr.mxu0 0.0
    %517 = vmatpush1.msra.mxu0 %v44
    %518 = vmatprep.subr.mxu0 0.0
    %519 = vmatpush1.msra.mxu0 0.0
    %520 = vmatprep.subr.mxu0 0.0
    %521 = vmatpush1.msra.mxu0 0.0
    %522 = vmatprep.subr.mxu0 0.0
    %523 = vmatpush1.msra.mxu0 0.0
    %524 = vmatprep.subr.mxu0 0.0
    %525 = vmatpush1.msra.mxu0 0.0
    %526 = vmatprep.subr.mxu0 0.0
    %527 = vmatpush1.msra.mxu0 0.0
    %528 = vmatprep.subr.mxu0 0.0
    %529 = vmatpush1.msra.mxu0 0.0
    %530 = vmatprep.subr.mxu0 0.0
    %531 = vmatpush1.msra.mxu0 0.0
    %532 = vmatprep.subr.mxu0 0.0
    %533 = vmatpush1.msra.mxu0 0.0
    %534 = vmatprep.subr.mxu0 0.0
    %535 = vmatpush1.msra.mxu0 0.0
    %536 = vmatprep.subr.mxu0 0.0
    %537 = vmatpush1.msra.mxu0 0.0
    %538 = vmatprep.subr.mxu0 0.0
    %539 = vmatpush1.msra.mxu0 0.0
    %540 = vmatprep.subr.mxu0 0.0
    %541 = vmatpush1.msra.mxu0 0.0
    %542 = vmatprep.subr.mxu0 0.0
    %543 = vmatpush1.msra.mxu0 0.0
    %544 = vmatprep.subr.mxu0 0.0
    %545 = vmatpush1.msra.mxu0 0.0
    %546 = vmatprep.subr.mxu0 0.0
    %547 = vmatpush1.msra.mxu0 0.0
    %548 = vmatprep.subr.mxu0 0.0
    %549 = vmatpush1.msra.mxu0 0.0
    %550 = vmatprep.subr.mxu0 0.0
    %551 = vmatpush1.msra.mxu0 0.0
    %552 = vmatprep.subr.mxu0 0.0
    %553 = vmatpush1.msra.mxu0 0.0
    %554 = vmatprep.subr.mxu0 0.0
    %555 = vmatpush1.msra.mxu0 0.0
    %556 = vmatprep.subr.mxu0 0.0
    %557 = vmatpush1.msra.mxu0 0.0
    %558 = vmatprep.subr.mxu0 0.0
    %559 = vmatpush1.msra.mxu0 0.0
    %560 = vmatprep.subr.mxu0 0.0
    %561 = vmatpush1.msra.mxu0 0.0
    %562 = vmatprep.subr.mxu0 0.0
    %563 = vmatpush1.msra.mxu0 0.0
    %564 = vmatprep.subr.mxu0 0.0
    %565 = vmatpush1.msra.mxu0 0.0
    %566 = vmatprep.subr.mxu0 0.0
    %567 = vmatpush1.msra.mxu0 0.0
    %568 = vmatprep.subr.mxu0 0.0
    %569 = vmatpush1.msra.mxu0 0.0
    %570 = vmatprep.subr.mxu0 0.0
    %571 = vmatpush1.msra.mxu0 0.0
    %572 = vmatprep.subr.mxu0 0.0
    %573 = vmatpush1.msra.mxu0 0.0
    %574 = vmatprep.mubr.f32.mxu0 0.0
    %575 = vmatmul.mubr.f32.gmra.mrb[0].mxu0 %v508
    %v576 = vpop.f32.mrb[0].mxu0
    %v577 = vadd.f32 0.0, %v576
    %v578 = vpop.f32.mrb[0].mxu0
    %579 = vdwg.mxu0
    %v580 = vadd.f32 %v80, %v577
    %v581 = vadd.f32 %v580, %v175
    %v582 = vxor.u32 %v581, 2147483648
    %v583 = vmul.f32 %v582, 1.442695
    %v584 = vpow.pop %v583
    %v585 = vadd.f32 %v584, 1.0
    %v586 = vrcp.pop %v585
    %v587 = vmul.f32 1.0, %v586
    %v588 = vtanh.pop %v581
    %v589 = vmul.f32 %v587, %v498
    %591 = vrot.lane.b32.xlu0 %v588, 32
    %v592 = vpop.permute.xlu0 %591
    %v594 = vmul.f32 %v587, %v592
    %596 = vrot.lane.b32.xlu0 %v594, 32
    %v597 = vpop.permute.xlu0 %596
    %v599 = vadd.f32 %v589, %v597
    %v600 = vtanh.pop %v599
    %602 = vrot.lane.b32.xlu0 %v600, 32
    %v603 = vpop.permute.xlu0 %602
    %v605 = vmul.f32 %v587, %v603
    %607 = vrot.lane.b32.xlu0 %v605, 64
    %v608 = vpop.permute.xlu0 %607
    %v609 = vsel %vm96, %v608, 0
    %611 = vmatprep.subr.mxu0 0.0
    %612 = vmatpush1.msra.mxu0 %v41
    %613 = vmatprep.subr.mxu0 0.0
    %614 = vmatpush1.msra.mxu0 %v42
    %615 = vmatprep.subr.mxu0 0.0
    %616 = vmatpush1.msra.mxu0 %v43
    %617 = vmatprep.subr.mxu0 0.0
    %618 = vmatpush1.msra.mxu0 %v44
    %619 = vmatprep.subr.mxu0 0.0
    %620 = vmatpush1.msra.mxu0 0.0
    %621 = vmatprep.subr.mxu0 0.0
    %622 = vmatpush1.msra.mxu0 0.0
    %623 = vmatprep.subr.mxu0 0.0
    %624 = vmatpush1.msra.mxu0 0.0
    %625 = vmatprep.subr.mxu0 0.0
    %626 = vmatpush1.msra.mxu0 0.0
    %627 = vmatprep.subr.mxu0 0.0
    %628 = vmatpush1.msra.mxu0 0.0
    %629 = vmatprep.subr.mxu0 0.0
    %630 = vmatpush1.msra.mxu0 0.0
    %631 = vmatprep.subr.mxu0 0.0
    %632 = vmatpush1.msra.mxu0 0.0
    %633 = vmatprep.subr.mxu0 0.0
    %634 = vmatpush1.msra.mxu0 0.0
    %635 = vmatprep.subr.mxu0 0.0
    %636 = vmatpush1.msra.mxu0 0.0
    %637 = vmatprep.subr.mxu0 0.0
    %638 = vmatpush1.msra.mxu0 0.0
    %639 = vmatprep.subr.mxu0 0.0
    %640 = vmatpush1.msra.mxu0 0.0
    %641 = vmatprep.subr.mxu0 0.0
    %642 = vmatpush1.msra.mxu0 0.0
    %643 = vmatprep.subr.mxu0 0.0
    %644 = vmatpush1.msra.mxu0 0.0
    %645 = vmatprep.subr.mxu0 0.0
    %646 = vmatpush1.msra.mxu0 0.0
    %647 = vmatprep.subr.mxu0 0.0
    %648 = vmatpush1.msra.mxu0 0.0
    %649 = vmatprep.subr.mxu0 0.0
    %650 = vmatpush1.msra.mxu0 0.0
    %651 = vmatprep.subr.mxu0 0.0
    %652 = vmatpush1.msra.mxu0 0.0
    %653 = vmatprep.subr.mxu0 0.0
    %654 = vmatpush1.msra.mxu0 0.0
    %655 = vmatprep.subr.mxu0 0.0
    %656 = vmatpush1.msra.mxu0 0.0
    %657 = vmatprep.subr.mxu0 0.0
    %658 = vmatpush1.msra.mxu0 0.0
    %659 = vmatprep.subr.mxu0 0.0
    %660 = vmatpush1.msra.mxu0 0.0
    %661 = vmatprep.subr.mxu0 0.0
    %662 = vmatpush1.msra.mxu0 0.0
    %663 = vmatprep.subr.mxu0 0.0
    %664 = vmatpush1.msra.mxu0 0.0
    %665 = vmatprep.subr.mxu0 0.0
    %666 = vmatpush1.msra.mxu0 0.0
    %667 = vmatprep.subr.mxu0 0.0
    %668 = vmatpush1.msra.mxu0 0.0
    %669 = vmatprep.subr.mxu0 0.0
    %670 = vmatpush1.msra.mxu0 0.0
    %671 = vmatprep.subr.mxu0 0.0
    %672 = vmatpush1.msra.mxu0 0.0
    %673 = vmatprep.subr.mxu0 0.0
    %674 = vmatpush1.msra.mxu0 0.0
    %675 = vmatprep.mubr.f32.mxu0 0.0
    %676 = vmatmul.mubr.f32.gmra.mrb[0].mxu0 %v609
    %v677 = vpop.f32.mrb[0].mxu0
    %v678 = vadd.f32 0.0, %v677
    %v679 = vpop.f32.mrb[0].mxu0
    %680 = vdwg.mxu0
    %v681 = vadd.f32 %v85, %v678
    %v682 = vadd.f32 %v681, %v175
    %v683 = vxor.u32 %v682, 2147483648
    %v684 = vmul.f32 %v683, 1.442695
    %v685 = vpow.pop %v684
    %v686 = vadd.f32 %v685, 1.0
    %v687 = vrcp.pop %v686
    %v688 = vmul.f32 1.0, %v687
    %v689 = vtanh.pop %v682
    %v690 = vmul.f32 %v688, %v599
    %692 = vrot.lane.b32.xlu0 %v689, 32
    %v693 = vpop.permute.xlu0 %692
    %v695 = vmul.f32 %v688, %v693
    %697 = vrot.lane.b32.xlu0 %v695, 32
    %v698 = vpop.permute.xlu0 %697
    %v700 = vadd.f32 %v690, %v698
    %v701 = vtanh.pop %v700
    %703 = vrot.lane.b32.xlu0 %v701, 32
    %v704 = vpop.permute.xlu0 %703
    %v706 = vmul.f32 %v688, %v704
    %708 = vrot.lane.b32.xlu0 %v706, 64
    %v709 = vpop.permute.xlu0 %708
    %v710 = vsel %vm96, %v709, 0
    %712 = vmatprep.subr.mxu0 0.0
    %713 = vmatpush1.msra.mxu0 %v41
    %714 = vmatprep.subr.mxu0 0.0
    %715 = vmatpush1.msra.mxu0 %v42
    %716 = vmatprep.subr.mxu0 0.0
    %717 = vmatpush1.msra.mxu0 %v43
    %718 = vmatprep.subr.mxu0 0.0
    %719 = vmatpush1.msra.mxu0 %v44
    %720 = vmatprep.subr.mxu0 0.0
    %721 = vmatpush1.msra.mxu0 0.0
    %722 = vmatprep.subr.mxu0 0.0
    %723 = vmatpush1.msra.mxu0 0.0
    %724 = vmatprep.subr.mxu0 0.0
    %725 = vmatpush1.msra.mxu0 0.0
    %726 = vmatprep.subr.mxu0 0.0
    %727 = vmatpush1.msra.mxu0 0.0
    %728 = vmatprep.subr.mxu0 0.0
    %729 = vmatpush1.msra.mxu0 0.0
    %730 = vmatprep.subr.mxu0 0.0
    %731 = vmatpush1.msra.mxu0 0.0
    %732 = vmatprep.subr.mxu0 0.0
    %733 = vmatpush1.msra.mxu0 0.0
    %734 = vmatprep.subr.mxu0 0.0
    %735 = vmatpush1.msra.mxu0 0.0
    %736 = vmatprep.subr.mxu0 0.0
    %737 = vmatpush1.msra.mxu0 0.0
    %738 = vmatprep.subr.mxu0 0.0
    %739 = vmatpush1.msra.mxu0 0.0
    %740 = vmatprep.subr.mxu0 0.0
    %741 = vmatpush1.msra.mxu0 0.0
    %742 = vmatprep.subr.mxu0 0.0
    %743 = vmatpush1.msra.mxu0 0.0
    %744 = vmatprep.subr.mxu0 0.0
    %745 = vmatpush1.msra.mxu0 0.0
    %746 = vmatprep.subr.mxu0 0.0
    %747 = vmatpush1.msra.mxu0 0.0
    %748 = vmatprep.subr.mxu0 0.0
    %749 = vmatpush1.msra.mxu0 0.0
    %750 = vmatprep.subr.mxu0 0.0
    %751 = vmatpush1.msra.mxu0 0.0
    %752 = vmatprep.subr.mxu0 0.0
    %753 = vmatpush1.msra.mxu0 0.0
    %754 = vmatprep.subr.mxu0 0.0
    %755 = vmatpush1.msra.mxu0 0.0
    %756 = vmatprep.subr.mxu0 0.0
    %757 = vmatpush1.msra.mxu0 0.0
    %758 = vmatprep.subr.mxu0 0.0
    %759 = vmatpush1.msra.mxu0 0.0
    %760 = vmatprep.subr.mxu0 0.0
    %761 = vmatpush1.msra.mxu0 0.0
    %762 = vmatprep.subr.mxu0 0.0
    %763 = vmatpush1.msra.mxu0 0.0
    %764 = vmatprep.subr.mxu0 0.0
    %765 = vmatpush1.msra.mxu0 0.0
    %766 = vmatprep.subr.mxu0 0.0
    %767 = vmatpush1.msra.mxu0 0.0
    %768 = vmatprep.subr.mxu0 0.0
    %769 = vmatpush1.msra.mxu0 0.0
    %770 = vmatprep.subr.mxu0 0.0
    %771 = vmatpush1.msra.mxu0 0.0
    %772 = vmatprep.subr.mxu0 0.0
    %773 = vmatpush1.msra.mxu0 0.0
    %774 = vmatprep.subr.mxu0 0.0
    %775 = vmatpush1.msra.mxu0 0.0
    %776 = vmatprep.mubr.f32.mxu0 0.0
    %777 = vmatmul.mubr.f32.gmra.mrb[0].mxu0 %v710
    %v778 = vpop.f32.mrb[0].mxu0
    %v779 = vadd.f32 0.0, %v778
    %v780 = vpop.f32.mrb[0].mxu0
    %781 = vdwg.mxu0
    %v782 = vadd.f32 %v90, %v779
    %v783 = vadd.f32 %v782, %v175
    %v784 = vxor.u32 %v783, 2147483648
    %v785 = vmul.f32 %v784, 1.442695
    %v786 = vpow.pop %v785
    %v787 = vadd.f32 %v786, 1.0
    %v788 = vrcp.pop %v787
    %v789 = vmul.f32 1.0, %v788
    %v790 = vtanh.pop %v783
    %v791 = vmul.f32 %v789, %v700
    %793 = vrot.lane.b32.xlu0 %v790, 32
    %v794 = vpop.permute.xlu0 %793
    %v796 = vmul.f32 %v789, %v794
    %798 = vrot.lane.b32.xlu0 %v796, 32
    %v799 = vpop.permute.xlu0 %798
    %v801 = vadd.f32 %v791, %v799
    %v802 = vtanh.pop %v801
    %804 = vrot.lane.b32.xlu0 %v802, 32
    %v805 = vpop.permute.xlu0 %804
    %v807 = vmul.f32 %v789, %v805
    %809 = vrot.lane.b32.xlu0 %v807, 64
    %v810 = vpop.permute.xlu0 %809
    %v811 = vsel %vm96, %v810, 0
    %813 = vmatprep.subr.mxu0 0.0
    %814 = vmatpush1.msra.mxu0 %v41
    %815 = vmatprep.subr.mxu0 0.0
    %816 = vmatpush1.msra.mxu0 %v42
    %817 = vmatprep.subr.mxu0 0.0
    %818 = vmatpush1.msra.mxu0 %v43
    %819 = vmatprep.subr.mxu0 0.0
    %820 = vmatpush1.msra.mxu0 %v44
    %821 = vmatprep.subr.mxu0 0.0
    %822 = vmatpush1.msra.mxu0 0.0
    %823 = vmatprep.subr.mxu0 0.0
    %824 = vmatpush1.msra.mxu0 0.0
    %825 = vmatprep.subr.mxu0 0.0
    %826 = vmatpush1.msra.mxu0 0.0
    %827 = vmatprep.subr.mxu0 0.0
    %828 = vmatpush1.msra.mxu0 0.0
    %829 = vmatprep.subr.mxu0 0.0
    %830 = vmatpush1.msra.mxu0 0.0
    %831 = vmatprep.subr.mxu0 0.0
    %832 = vmatpush1.msra.mxu0 0.0
    %833 = vmatprep.subr.mxu0 0.0
    %834 = vmatpush1.msra.mxu0 0.0
    %835 = vmatprep.subr.mxu0 0.0
    %836 = vmatpush1.msra.mxu0 0.0
    %837 = vmatprep.subr.mxu0 0.0
    %838 = vmatpush1.msra.mxu0 0.0
    %839 = vmatprep.subr.mxu0 0.0
    %840 = vmatpush1.msra.mxu0 0.0
    %841 = vmatprep.subr.mxu0 0.0
    %842 = vmatpush1.msra.mxu0 0.0
    %843 = vmatprep.subr.mxu0 0.0
    %844 = vmatpush1.msra.mxu0 0.0
    %845 = vmatprep.subr.mxu0 0.0
    %846 = vmatpush1.msra.mxu0 0.0
    %847 = vmatprep.subr.mxu0 0.0
    %848 = vmatpush1.msra.mxu0 0.0
    %849 = vmatprep.subr.mxu0 0.0
    %850 = vmatpush1.msra.mxu0 0.0
    %851 = vmatprep.subr.mxu0 0.0
    %852 = vmatpush1.msra.mxu0 0.0
    %853 = vmatprep.subr.mxu0 0.0
    %854 = vmatpush1.msra.mxu0 0.0
    %855 = vmatprep.subr.mxu0 0.0
    %856 = vmatpush1.msra.mxu0 0.0
    %857 = vmatprep.subr.mxu0 0.0
    %858 = vmatpush1.msra.mxu0 0.0
    %859 = vmatprep.subr.mxu0 0.0
    %860 = vmatpush1.msra.mxu0 0.0
    %861 = vmatprep.subr.mxu0 0.0
    %862 = vmatpush1.msra.mxu0 0.0
    %863 = vmatprep.subr.mxu0 0.0
    %864 = vmatpush1.msra.mxu0 0.0
    %865 = vmatprep.subr.mxu0 0.0
    %866 = vmatpush1.msra.mxu0 0.0
    %867 = vmatprep.subr.mxu0 0.0
    %868 = vmatpush1.msra.mxu0 0.0
    %869 = vmatprep.subr.mxu0 0.0
    %870 = vmatpush1.msra.mxu0 0.0
    %871 = vmatprep.subr.mxu0 0.0
    %872 = vmatpush1.msra.mxu0 0.0
    %873 = vmatprep.subr.mxu0 0.0
    %874 = vmatpush1.msra.mxu0 0.0
    %875 = vmatprep.subr.mxu0 0.0
    %876 = vmatpush1.msra.mxu0 0.0
    %877 = vmatprep.mubr.f32.mxu0 0.0
    %878 = vmatmul.mubr.f32.gmra.mrb[0].mxu0 %v811
    %v879 = vpop.f32.mrb[0].mxu0
    %v880 = vadd.f32 0.0, %v879
    %v881 = vpop.f32.mrb[0].mxu0
    %882 = vdwg.mxu0
    %v883 = vadd.f32 %v95, %v880
    %v884 = vadd.f32 %v883, %v175
    %v885 = vxor.u32 %v884, 2147483648
    %v886 = vmul.f32 %v885, 1.442695
    %v887 = vpow.pop %v886
    %v888 = vadd.f32 %v887, 1.0
    %v889 = vrcp.pop %v888
    %v890 = vmul.f32 1.0, %v889
    %v891 = vtanh.pop %v884
    %v892 = vmul.f32 %v890, %v801
    %894 = vrot.lane.b32.xlu0 %v891, 32
    %v895 = vpop.permute.xlu0 %894
    %v897 = vmul.f32 %v890, %v895
    %899 = vrot.lane.b32.xlu0 %v897, 32
    %v900 = vpop.permute.xlu0 %899
    %v902 = vadd.f32 %v892, %v900
    %v903 = vtanh.pop %v902
    %905 = vrot.lane.b32.xlu0 %v903, 32
    %v906 = vpop.permute.xlu0 %905
    %v908 = vmul.f32 %v890, %v906
    %v910 = vunpack.c.l.s4 1966171168
    %v911 = vunpack.c.0.s8 %v910
    %v912 = vlaneseq
    %v913 = vshrl.u32 %v912, 7
    %v914 = vsub.s32 %v911, %v913
    %v915 = vrot.slane %v201, %v914
    %v916 = vcombine.high %v915, %v915
    %v918 = vunpack.c.l.s4 1966171168
    %v919 = vunpack.c.0.s8 %v918
    %v920 = vlaneseq
    %v921 = vshrl.u32 %v920, 7
    %v922 = vsub.s32 %v919, %v921
    %v923 = vrot.slane %v915, %v922
    %v925 = vunpack.c.l.s4 1966171168
    %v926 = vunpack.c.0.s8 %v925
    %v927 = vlaneseq
    %v928 = vshrl.u32 %v927, 7
    %v929 = vsub.s32 %v926, %v928
    %v930 = vrot.slane %v916, %v929
    %v934 = vunpack.c.l.s4 1966171168
    %v935 = vunpack.c.0.s8 %v934
    %v936 = vlaneseq
    %v937 = vshrl.u32 %v936, 7
    %v938 = vsub.s32 %v935, %v937
    %v939 = vrot.slane %v302, %v938
    %v940 = vcombine.high %v939, %v939
    %v942 = vunpack.c.l.s4 1966171168
    %v943 = vunpack.c.0.s8 %v942
    %v944 = vlaneseq
    %v945 = vshrl.u32 %v944, 7
    %v946 = vsub.s32 %v943, %v945
    %v947 = vrot.slane %v939, %v946
    %v949 = vunpack.c.l.s4 1966171168
    %v950 = vunpack.c.0.s8 %v949
    %v951 = vlaneseq
    %v952 = vshrl.u32 %v951, 7
    %v953 = vsub.s32 %v950, %v952
    %v954 = vrot.slane %v940, %v953
    %v956 = vunpack.c.l.s4 1966171168
    %v957 = vunpack.c.0.s8 %v956
    %v958 = vlaneseq
    %v959 = vshrl.u32 %v958, 7
    %v960 = vsub.s32 %v957, %v959
    %v961 = vrot.slane %v403, %v960
    %v962 = vcombine.high %v961, %v961
    %v964 = vunpack.c.l.s4 1966171168
    %v965 = vunpack.c.0.s8 %v964
    %v966 = vlaneseq
    %v967 = vshrl.u32 %v966, 7
    %v968 = vsub.s32 %v965, %v967
    %v969 = vrot.slane %v961, %v968
    %v971 = vunpack.c.l.s4 1966171168
    %v972 = vunpack.c.0.s8 %v971
    %v973 = vlaneseq
    %v974 = vshrl.u32 %v973, 7
    %v975 = vsub.s32 %v972, %v974
    %v976 = vrot.slane %v962, %v975
    %v978 = vunpack.c.l.s4 1966171168
    %v979 = vunpack.c.0.s8 %v978
    %v980 = vlaneseq
    %v981 = vshrl.u32 %v980, 7
    %v982 = vsub.s32 %v979, %v981
    %v983 = vrot.slane %v504, %v982
    %v984 = vcombine.high %v983, %v983
    %v986 = vunpack.c.l.s4 1966171168
    %v987 = vunpack.c.0.s8 %v986
    %v988 = vlaneseq
    %v989 = vshrl.u32 %v988, 7
    %v990 = vsub.s32 %v987, %v989
    %v991 = vrot.slane %v983, %v990
    %v993 = vunpack.c.l.s4 1966171168
    %v994 = vunpack.c.0.s8 %v993
    %v995 = vlaneseq
    %v996 = vshrl.u32 %v995, 7
    %v997 = vsub.s32 %v994, %v996
    %v998 = vrot.slane %v984, %v997
    %v1000 = vunpack.c.l.s4 1966171168
    %v1001 = vunpack.c.0.s8 %v1000
    %v1002 = vlaneseq
    %v1003 = vshrl.u32 %v1002, 7
    %v1004 = vsub.s32 %v1001, %v1003
    %v1005 = vrot.slane %v605, %v1004
    %v1006 = vcombine.high %v1005, %v1005
    %v1008 = vunpack.c.l.s4 1966171168
    %v1009 = vunpack.c.0.s8 %v1008
    %v1010 = vlaneseq
    %v1011 = vshrl.u32 %v1010, 7
    %v1012 = vsub.s32 %v1009, %v1011
    %v1013 = vrot.slane %v1005, %v1012
    %v1015 = vunpack.c.l.s4 1966171168
    %v1016 = vunpack.c.0.s8 %v1015
    %v1017 = vlaneseq
    %v1018 = vshrl.u32 %v1017, 7
    %v1019 = vsub.s32 %v1016, %v1018
    %v1020 = vrot.slane %v1006, %v1019
    %v1022 = vunpack.c.l.s4 1966171168
    %v1023 = vunpack.c.0.s8 %v1022
    %v1024 = vlaneseq
    %v1025 = vshrl.u32 %v1024, 7
    %v1026 = vsub.s32 %v1023, %v1025
    %v1027 = vrot.slane %v706, %v1026
    %v1028 = vcombine.high %v1027, %v1027
    %v1030 = vunpack.c.l.s4 1966171168
    %v1031 = vunpack.c.0.s8 %v1030
    %v1032 = vlaneseq
    %v1033 = vshrl.u32 %v1032, 7
    %v1034 = vsub.s32 %v1031, %v1033
    %v1035 = vrot.slane %v1027, %v1034
    %v1037 = vunpack.c.l.s4 1966171168
    %v1038 = vunpack.c.0.s8 %v1037
    %v1039 = vlaneseq
    %v1040 = vshrl.u32 %v1039, 7
    %v1041 = vsub.s32 %v1038, %v1040
    %v1042 = vrot.slane %v1028, %v1041
    %v1044 = vunpack.c.l.s4 1966171168
    %v1045 = vunpack.c.0.s8 %v1044
    %v1046 = vlaneseq
    %v1047 = vshrl.u32 %v1046, 7
    %v1048 = vsub.s32 %v1045, %v1047
    %v1049 = vrot.slane %v807, %v1048
    %v1050 = vcombine.high %v1049, %v1049
    %v1052 = vunpack.c.l.s4 1966171168
    %v1053 = vunpack.c.0.s8 %v1052
    %v1054 = vlaneseq
    %v1055 = vshrl.u32 %v1054, 7
    %v1056 = vsub.s32 %v1053, %v1055
    %v1057 = vrot.slane %v1049, %v1056
    %v1059 = vunpack.c.l.s4 1966171168
    %v1060 = vunpack.c.0.s8 %v1059
    %v1061 = vlaneseq
    %v1062 = vshrl.u32 %v1061, 7
    %v1063 = vsub.s32 %v1060, %v1062
    %v1064 = vrot.slane %v1050, %v1063
    %v1067 = vunpack.c.l.s4 1966171168
    %v1068 = vunpack.c.0.s8 %v1067
    %v1069 = vlaneseq
    %v1070 = vshrl.u32 %v1069, 7
    %v1071 = vsub.s32 %v1068, %v1070
    %v1072 = vrot.slane %v908, %v1071
    %v1073 = vcombine.high %v1072, %v1072
    %v1075 = vunpack.c.l.s4 1966171168
    %v1076 = vunpack.c.0.s8 %v1075
    %v1077 = vlaneseq
    %v1078 = vshrl.u32 %v1077, 7
    %v1079 = vsub.s32 %v1076, %v1078
    %v1080 = vrot.slane %v1072, %v1079
    %v1082 = vunpack.c.l.s4 1966171168
    %v1083 = vunpack.c.0.s8 %v1082
    %v1084 = vlaneseq
    %v1085 = vshrl.u32 %v1084, 7
    %v1086 = vsub.s32 %v1083, %v1085
    %v1087 = vrot.slane %v1073, %v1086
    %v1088 = vlaneseq
    %v1089 = vshrl.u32 %v1088, 7
    %v1090 = vsub.s32 0, %v1089
    %v1091 = vrot.slane %v947, %v1090
    %v1092 = vlaneseq
    %v1093 = vshrl.u32 %v1092, 7
    %v1094 = vsub.s32 0, %v1093
    %v1095 = vrot.slane %v954, %v1094
    %v1098 = vlaneseq
    %v1099 = vshrl.u32 %v1098, 7
    %v1100 = vsub.s32 0, %v1099
    %v1101 = vrot.slane %v969, %v1100
    %v1102 = vlaneseq
    %v1103 = vshrl.u32 %v1102, 7
    %v1104 = vsub.s32 0, %v1103
    %v1105 = vrot.slane %v976, %v1104
    %v1108 = vlaneseq
    %v1109 = vshrl.u32 %v1108, 7
    %v1110 = vsub.s32 0, %v1109
    %v1111 = vrot.slane %v991, %v1110
    %v1112 = vlaneseq
    %v1113 = vshrl.u32 %v1112, 7
    %v1114 = vsub.s32 0, %v1113
    %v1115 = vrot.slane %v998, %v1114
    %v1118 = vlaneseq
    %v1119 = vshrl.u32 %v1118, 7
    %v1120 = vsub.s32 0, %v1119
    %v1121 = vrot.slane %v1013, %v1120
    %v1122 = vlaneseq
    %v1123 = vshrl.u32 %v1122, 7
    %v1124 = vsub.s32 0, %v1123
    %v1125 = vrot.slane %v1020, %v1124
    %v1128 = vlaneseq
    %v1129 = vshrl.u32 %v1128, 7
    %v1130 = vsub.s32 0, %v1129
    %v1131 = vrot.slane %v1035, %v1130
    %v1132 = vlaneseq
    %v1133 = vshrl.u32 %v1132, 7
    %v1134 = vsub.s32 0, %v1133
    %v1135 = vrot.slane %v1042, %v1134
    %v1138 = vlaneseq
    %v1139 = vshrl.u32 %v1138, 7
    %v1140 = vsub.s32 0, %v1139
    %v1141 = vrot.slane %v1057, %v1140
    %v1142 = vlaneseq
    %v1143 = vshrl.u32 %v1142, 7
    %v1144 = vsub.s32 0, %v1143
    %v1145 = vrot.slane %v1064, %v1144
    %v1148 = vlaneseq
    %v1149 = vshrl.u32 %v1148, 7
    %v1150 = vsub.s32 0, %v1149
    %v1151 = vrot.slane %v1080, %v1150
    %v1152 = vlaneseq
    %v1153 = vshrl.u32 %v1152, 7
    %v1154 = vsub.s32 0, %v1153
    %v1155 = vrot.slane %v1087, %v1154
    %vm1158 = vcmask 1040384
    %v1159 = vsel %vm1158, %v923, %v1091
    %v1160 = vsel %vm1158, %v930, %v1095
    %vm1161 = vcmask 1041408
    %v1162 = vsel %vm1161, %v1159, %v1101
    %v1163 = vsel %vm1161, %v1160, %v1105
    %vm1164 = vcmask 1042432
    %v1165 = vsel %vm1164, %v1162, %v1111
    %v1166 = vsel %vm1164, %v1163, %v1115
    %vm1167 = vcmask 1043456
    %v1168 = vsel %vm1167, %v1165, %v1121
    %v1169 = vsel %vm1167, %v1166, %v1125
    %vm1170 = vcmask 1044480
    %v1171 = vsel %vm1170, %v1168, %v1131
    %v1172 = vsel %vm1170, %v1169, %v1135
    %vm1173 = vcmask 1045504
    %v1174 = vsel %vm1173, %v1171, %v1141
    %v1175 = vsel %vm1173, %v1172, %v1145
    %vm1176 = vcmask 1046528
    %v1177 = vsel %vm1176, %v1174, %v1151
    %v1178 = vsel %vm1176, %v1175, %v1155
    %v1180 = vlaneseq
    %v1181 = vshrl.u32 %v1180, 7
    %v1182 = vsub.s32 0, %v1181
    %v1183 = vrot.slane %v46, %v1182
    %1184 = vrot.lane.b32.xlu0 %v1183, 64
    %v1185 = vpop.permute.xlu0 %1184
    %v1187 = vmul.f32 %v1177, %v1185
    %v1188 = vmul.f32 %v1178, %v1185
    %1191 = vrot.lane.b32.xlu0 %v1187, 64
    %v1192 = vpop.permute.xlu0 %1191
    %1193 = vrot.lane.b32.xlu0 %v1188, 64
    %v1194 = vpop.permute.xlu0 %1193
    %v1197 = vsel %vm96, %v1192, 0.0
    %1198 = vadd.xlane.f32.xlu0 %v1197
    %v1199 = vpop.xlane.xlu0 %1198
    %v1200 = vsel %vm96, %v1194, 0.0
    %1201 = vadd.xlane.f32.xlu0 %v1200
    %v1202 = vpop.xlane.xlu0 %1201
    %v1204 = vlaneseq
    %v1205 = vshrl.u32 %v1204, 7
    %v1206 = vsub.s32 0, %v1205
    %v1207 = vrot.slane %v47, %v1206
    %1208 = vset.pattern.permute.xlu0 0
    %1209 = vperm.xlu0 %1208, %v1207
    %v1210 = vpop.permute.xlu0 %1209
    %v1212 = vadd.f32 %v1199, %v1210
    %v1213 = vadd.f32 %v1202, %v1210
    %v1214 = vmul.f32 %v908, %v1185
    %1216 = vrot.lane.b32.xlu0 %v1214, 64
    %v1217 = vpop.permute.xlu0 %1216
    %vm1219 = vcmask 254976
    %v1220 = vsel %vm1219, %v1217, 0.0
    %1221 = vadd.xlane.f32.xlu0 %v1220
    %v1222 = vpop.xlane.xlu0 %1221
    %v1224 = vadd.f32 %v1222, %v1207
    %1226 = vset.pattern.permute.xlu0 0
    %1227 = vperm.xlu0 %1226, %v1224
    %v1228 = vpop.permute.xlu0 %1227
    %v1230 = vmul.f32 %v1228, %v58
    %1231 = vrot.lane.b32.xlu0 %v908, 64
    %v1232 = vpop.permute.xlu0 %1231
    %v1233 = vsel %vm96, %v1232, 0
    %1235 = vmatprep.subr.mxu0 0.0
    %1236 = vmatpush1.msra.mxu0 %v41
    %1237 = vmatprep.subr.mxu0 0.0
    %1238 = vmatpush1.msra.mxu0 %v42
    %1239 = vmatprep.subr.mxu0 0.0
    %1240 = vmatpush1.msra.mxu0 %v43
    %1241 = vmatprep.subr.mxu0 0.0
    %1242 = vmatpush1.msra.mxu0 %v44
    %1243 = vmatprep.subr.mxu0 0.0
    %1244 = vmatpush1.msra.mxu0 0.0
    %1245 = vmatprep.subr.mxu0 0.0
    %1246 = vmatpush1.msra.mxu0 0.0
    %1247 = vmatprep.subr.mxu0 0.0
    %1248 = vmatpush1.msra.mxu0 0.0
    %1249 = vmatprep.subr.mxu0 0.0
    %1250 = vmatpush1.msra.mxu0 0.0
    %1251 = vmatprep.subr.mxu0 0.0
    %1252 = vmatpush1.msra.mxu0 0.0
    %1253 = vmatprep.subr.mxu0 0.0
    %1254 = vmatpush1.msra.mxu0 0.0
    %1255 = vmatprep.subr.mxu0 0.0
    %1256 = vmatpush1.msra.mxu0 0.0
    %1257 = vmatprep.subr.mxu0 0.0
    %1258 = vmatpush1.msra.mxu0 0.0
    %1259 = vmatprep.subr.mxu0 0.0
    %1260 = vmatpush1.msra.mxu0 0.0
    %1261 = vmatprep.subr.mxu0 0.0
    %1262 = vmatpush1.msra.mxu0 0.0
    %1263 = vmatprep.subr.mxu0 0.0
    %1264 = vmatpush1.msra.mxu0 0.0
    %1265 = vmatprep.subr.mxu0 0.0
    %1266 = vmatpush1.msra.mxu0 0.0
    %1267 = vmatprep.subr.mxu0 0.0
    %1268 = vmatpush1.msra.mxu0 0.0
    %1269 = vmatprep.subr.mxu0 0.0
    %1270 = vmatpush1.msra.mxu0 0.0
    %1271 = vmatprep.subr.mxu0 0.0
    %1272 = vmatpush1.msra.mxu0 0.0
    %1273 = vmatprep.subr.mxu0 0.0
    %1274 = vmatpush1.msra.mxu0 0.0
    %1275 = vmatprep.subr.mxu0 0.0
    %1276 = vmatpush1.msra.mxu0 0.0
    %1277 = vmatprep.subr.mxu0 0.0
    %1278 = vmatpush1.msra.mxu0 0.0
    %1279 = vmatprep.subr.mxu0 0.0
    %1280 = vmatpush1.msra.mxu0 0.0
    %1281 = vmatprep.subr.mxu0 0.0
    %1282 = vmatpush1.msra.mxu0 0.0
    %1283 = vmatprep.subr.mxu0 0.0
    %1284 = vmatpush1.msra.mxu0 0.0
    %1285 = vmatprep.subr.mxu0 0.0
    %1286 = vmatpush1.msra.mxu0 0.0
    %1287 = vmatprep.subr.mxu0 0.0
    %1288 = vmatpush1.msra.mxu0 0.0
    %1289 = vmatprep.subr.mxu0 0.0
    %1290 = vmatpush1.msra.mxu0 0.0
    %1291 = vmatprep.subr.mxu0 0.0
    %1292 = vmatpush1.msra.mxu0 0.0
    %1293 = vmatprep.subr.mxu0 0.0
    %1294 = vmatpush1.msra.mxu0 0.0
    %1295 = vmatprep.subr.mxu0 0.0
    %1296 = vmatpush1.msra.mxu0 0.0
    %1297 = vmatprep.subr.mxu0 0.0
    %1298 = vmatpush1.msra.mxu0 0.0
    %1299 = vmatprep.mubr.f32.mxu0 0.0
    %1300 = vmatmul.mubr.f32.gmra.mrb[0].mxu0 %v1233
    %v1301 = vpop.f32.mrb[0].mxu0
    %v1302 = vadd.f32 0.0, %v1301
    %v1303 = vpop.f32.mrb[0].mxu0
    %1304 = vdwg.mxu0
    %v1305 = vadd.f32 %v1230, %v1302
    %v1306 = vadd.f32 %v1305, %v175
    %v1307 = vxor.u32 %v1306, 2147483648
    %v1308 = vmul.f32 %v1307, 1.442695
    %v1309 = vpow.pop %v1308
    %v1310 = vadd.f32 %v1309, 1.0
    %v1311 = vrcp.pop %v1310
    %v1312 = vmul.f32 1.0, %v1311
    %v1313 = vtanh.pop %v1306
    %v1314 = vmul.f32 %v1312, %v902
    %1316 = vrot.lane.b32.xlu0 %v1313, 32
    %v1317 = vpop.permute.xlu0 %1316
    %v1319 = vmul.f32 %v1312, %v1317
    %1321 = vrot.lane.b32.xlu0 %v1319, 32
    %v1322 = vpop.permute.xlu0 %1321
    %v1324 = vadd.f32 %v1314, %v1322
    %v1325 = vtanh.pop %v1324
    %1327 = vrot.lane.b32.xlu0 %v1325, 32
    %v1328 = vpop.permute.xlu0 %1327
    %v1330 = vmul.f32 %v1312, %v1328
    %v1331 = vmul.f32 %v1330, %v1185
    %1333 = vrot.lane.b32.xlu0 %v1331, 64
    %v1334 = vpop.permute.xlu0 %1333
    %v1336 = vsel %vm1219, %v1334, 0.0
    %1337 = vadd.xlane.f32.xlu0 %v1336
    %v1338 = vpop.xlane.xlu0 %1337
    %v1339 = vadd.f32 %v1338, %v1207
    %1341 = vset.pattern.permute.xlu0 0
    %1342 = vperm.xlu0 %1341, %v1339
    %v1343 = vpop.permute.xlu0 %1342
    %v1345 = vmul.f32 %v1343, %v58
    %1347 = vrot.lane.b32.xlu0 %v1330, 64
    %v1348 = vpop.permute.xlu0 %1347
    %v1349 = vsel %vm96, %v1348, 0
    %1351 = vmatprep.subr.mxu0 0.0
    %1352 = vmatpush1.msra.mxu0 %v41
    %1353 = vmatprep.subr.mxu0 0.0
    %1354 = vmatpush1.msra.mxu0 %v42
    %1355 = vmatprep.subr.mxu0 0.0
    %1356 = vmatpush1.msra.mxu0 %v43
    %1357 = vmatprep.subr.mxu0 0.0
    %1358 = vmatpush1.msra.mxu0 %v44
    %1359 = vmatprep.subr.mxu0 0.0
    %1360 = vmatpush1.msra.mxu0 0.0
    %1361 = vmatprep.subr.mxu0 0.0
    %1362 = vmatpush1.msra.mxu0 0.0
    %1363 = vmatprep.subr.mxu0 0.0
    %1364 = vmatpush1.msra.mxu0 0.0
    %1365 = vmatprep.subr.mxu0 0.0
    %1366 = vmatpush1.msra.mxu0 0.0
    %1367 = vmatprep.subr.mxu0 0.0
    %1368 = vmatpush1.msra.mxu0 0.0
    %1369 = vmatprep.subr.mxu0 0.0
    %1370 = vmatpush1.msra.mxu0 0.0
    %1371 = vmatprep.subr.mxu0 0.0
    %1372 = vmatpush1.msra.mxu0 0.0
    %1373 = vmatprep.subr.mxu0 0.0
    %1374 = vmatpush1.msra.mxu0 0.0
    %1375 = vmatprep.subr.mxu0 0.0
    %1376 = vmatpush1.msra.mxu0 0.0
    %1377 = vmatprep.subr.mxu0 0.0
    %1378 = vmatpush1.msra.mxu0 0.0
    %1379 = vmatprep.subr.mxu0 0.0
    %1380 = vmatpush1.msra.mxu0 0.0
    %1381 = vmatprep.subr.mxu0 0.0
    %1382 = vmatpush1.msra.mxu0 0.0
    %1383 = vmatprep.subr.mxu0 0.0
    %1384 = vmatpush1.msra.mxu0 0.0
    %1385 = vmatprep.subr.mxu0 0.0
    %1386 = vmatpush1.msra.mxu0 0.0
    %1387 = vmatprep.subr.mxu0 0.0
    %1388 = vmatpush1.msra.mxu0 0.0
    %1389 = vmatprep.subr.mxu0 0.0
    %1390 = vmatpush1.msra.mxu0 0.0
    %1391 = vmatprep.subr.mxu0 0.0
    %1392 = vmatpush1.msra.mxu0 0.0
    %1393 = vmatprep.subr.mxu0 0.0
    %1394 = vmatpush1.msra.mxu0 0.0
    %1395 = vmatprep.subr.mxu0 0.0
    %1396 = vmatpush1.msra.mxu0 0.0
    %1397 = vmatprep.subr.mxu0 0.0
    %1398 = vmatpush1.msra.mxu0 0.0
    %1399 = vmatprep.subr.mxu0 0.0
    %1400 = vmatpush1.msra.mxu0 0.0
    %1401 = vmatprep.subr.mxu0 0.0
    %1402 = vmatpush1.msra.mxu0 0.0
    %1403 = vmatprep.subr.mxu0 0.0
    %1404 = vmatpush1.msra.mxu0 0.0
    %1405 = vmatprep.subr.mxu0 0.0
    %1406 = vmatpush1.msra.mxu0 0.0
    %1407 = vmatprep.subr.mxu0 0.0
    %1408 = vmatpush1.msra.mxu0 0.0
    %1409 = vmatprep.subr.mxu0 0.0
    %1410 = vmatpush1.msra.mxu0 0.0
    %1411 = vmatprep.subr.mxu0 0.0
    %1412 = vmatpush1.msra.mxu0 0.0
    %1413 = vmatprep.subr.mxu0 0.0
    %1414 = vmatpush1.msra.mxu0 0.0
    %1415 = vmatprep.mubr.f32.mxu0 0.0
    %1416 = vmatmul.mubr.f32.gmra.mrb[0].mxu0 %v1349
    %v1417 = vpop.f32.mrb[0].mxu0
    %v1418 = vadd.f32 0.0, %v1417
    %v1419 = vpop.f32.mrb[0].mxu0
    %1420 = vdwg.mxu0
    %v1421 = vadd.f32 %v1345, %v1418
    %v1422 = vadd.f32 %v1421, %v175
    %v1423 = vxor.u32 %v1422, 2147483648
    %v1424 = vmul.f32 %v1423, 1.442695
    %v1425 = vpow.pop %v1424
    %v1426 = vadd.f32 %v1425, 1.0
    %v1427 = vrcp.pop %v1426
    %v1428 = vmul.f32 1.0, %v1427
    %v1429 = vtanh.pop %v1422
    %v1430 = vmul.f32 %v1428, %v1324
    %1432 = vrot.lane.b32.xlu0 %v1429, 32
    %v1433 = vpop.permute.xlu0 %1432
    %v1435 = vmul.f32 %v1428, %v1433
    %1437 = vrot.lane.b32.xlu0 %v1435, 32
    %v1438 = vpop.permute.xlu0 %1437
    %v1440 = vadd.f32 %v1430, %v1438
    %v1441 = vtanh.pop %v1440
    %1443 = vrot.lane.b32.xlu0 %v1441, 32
    %v1444 = vpop.permute.xlu0 %1443
    %v1446 = vmul.f32 %v1428, %v1444
    %v1447 = vmul.f32 %v1446, %v1185
    %1449 = vrot.lane.b32.xlu0 %v1447, 64
    %v1450 = vpop.permute.xlu0 %1449
    %v1452 = vsel %vm1219, %v1450, 0.0
    %1453 = vadd.xlane.f32.xlu0 %v1452
    %v1454 = vpop.xlane.xlu0 %1453
    %v1455 = vadd.f32 %v1454, %v1207
    %v1458 = vlaneseq
    %v1459 = vand.u32 %v1458, 127
    %v1460 = vlaneseq
    %v1461 = vshrl.u32 %v1460, 7
    %v1462 = vsub.s32 %v1459, %v1461
    %v1463 = vrot.slane %v1212, %v1462
    %v1464 = vlaneseq
    %v1465 = vshrl.u32 %v1464, 7
    %v1466 = vsub.s32 %v1459, %v1465
    %v1467 = vrot.slane %v1213, %v1466
    %vm1468 = vcmask 1041409
    %v1469 = vsel %vm1468, %v1467, %v1463
    %1471 = vrot.lane.b32.xlu0 %v1339, 8
    %v1472 = vpop.permute.xlu0 %1471
    %1475 = vrot.lane.b32.xlu0 %v1455, 9
    %v1476 = vpop.permute.xlu0 %1475
    %vm1478 = vcmask 64512
    %v1479 = vsel %vm1478, %v1469, %v1472
    %vm1480 = vcmask 72704
    %v1481 = vsel %vm1480, %v1479, %v1476
    %vm1482 = vcmask 74752
    %1483 = vst.msk [vmem:[#allocation6] sm:$0x3] %vm1482, %v1481
    // Predicated region
    $region30: #{tpu_custom_call.1} parent=1 // pred_check
      _
    $region31: #{tpu_custom_call.1} parent=1 // pred_check_branch
      %1485 = sbr.rel (0) target = $region33
    $region32: #{tpu_custom_call.1} parent=1 // pred_region
      %s1487 = ssub.s32 32, 32
      %1488 = vsyncadd [#allocation5], %s1487
      %s1490 = sshll.u32 [#allocation6], 4
      %s1491 = int_to_ptr.vmem [resolvable:$true] %s1490
      %1493 = dma.vmem_to_hbm [thread:$0]  %s1491, 32, %s6, [#allocation5]
    $region33: #{tpu_custom_call.1} parent=1 // pred_fallthru
      _
    // Predicated region
    $region34: #{tpu_custom_call.1} parent=1 // pred_check
      _
    $region35: #{tpu_custom_call.1} parent=1 // pred_check_branch
      %1495 = sbr.rel (0) target = $region37
    $region36: #{tpu_custom_call.1} parent=1 // pred_region
      %1496 = dma.done [#allocation5], 32
    $region37: #{tpu_custom_call.1} parent=1 // pred_fallthru
      _
    %1497 = vsyncpa [#allocation4], 1
    %1498 = vsyncpa [#allocation5], 1

</llo_original>
